<compile_context>
chip_gen: v7x
topology: tpu7x:2x2x1
jax: 0.10.0
libtpu: 0.0.40
codegen_flags: <defaults>
</compile_context>

<pallas_src>
import functools

import jax
import jax.numpy as jnp
from jax.experimental import pallas as pl
from jax.experimental.pallas import tpu as pltpu

hidden_size = 8
input_size = 2
num_classes = 1
num_layers = 2  # fixed to 2, matching the module's global

# Lane/sublane padding constants (one f32 vreg = 8 sublanes x 128 lanes).
_BP = 128   # batch padded to full lane width
_IP = 8     # input_size padded to full sublane height
_CP = 8     # num_classes padded to full sublane height

# Lane offsets of each parameter inside the packed (8, 128) slab.
_OFF_WIH0 = 0    # (8, 8)  (input cols >= input_size are zero)
_OFF_WHH0 = 8    # (8, 8)
_OFF_WIH1 = 16   # (8, 8)
_OFF_WHH1 = 24   # (8, 8)
_OFF_WFC = 32    # (8, 8)  (rows >= num_classes are zero)
_OFF_B0 = 40     # (8, 1)  folded bih0 + bhh0
_OFF_B1 = 41     # (8, 1)  folded bih1 + bhh1
_OFF_BFC = 42    # (8, 1)  (rows >= num_classes are zero)
_SLAB_LANES = 43


def rnn_fc_kernel(x_ref, p_ref, out_ref, *, T, Bp):
    # Single vreg load of the packed parameter slab; static lane slices are cheap
    # one-time ops (hoisted out of the recurrence).
    p = p_ref[...]                                   # (8, 128)
    wih0 = p[:, _OFF_WIH0:_OFF_WIH0 + 8]             # (H, Ip)
    whh0 = p[:, _OFF_WHH0:_OFF_WHH0 + 8]             # (H, H)
    wih1 = p[:, _OFF_WIH1:_OFF_WIH1 + 8]             # (H, H)
    whh1 = p[:, _OFF_WHH1:_OFF_WHH1 + 8]             # (H, H)
    wfc = p[:, _OFF_WFC:_OFF_WFC + 8]                # (Cp, H) rows>=C zero
    b0 = p[:, _OFF_B0:_OFF_B0 + 1]                   # (H, 1)
    b1 = p[:, _OFF_B1:_OFF_B1 + 1]                   # (H, 1)
    bfc = p[:, _OFF_BFC:_OFF_BFC + 1]                # (Cp, 1)

    H = p_ref.shape[0]

    # Hoisted layer-0 input projection + folded bias: ONE MXU op for all steps.
    # (H, Ip) @ (Ip, T*Bp) -> (H, T*Bp); padded input rows are zero.
    xproj = jnp.dot(wih0, x_ref[...], preferred_element_type=jnp.float32) + b0

    # Column-major recurrent state: H on sublanes, (padded) batch on the 128 lanes.
    h0 = jnp.zeros((H, Bp), jnp.float32)
    h1 = jnp.zeros((H, Bp), jnp.float32)

    # T is static & tiny -> full unroll.  With the layer-1 dots split (no concat),
    # whh1 @ h1 is independent of this step's h0, so the unrolled DAG is the same
    # as an explicit two-layer wavefront: ~1 dependent matmul per step on the
    # critical path, the rest overlaps on the MXU.
    for t in range(T):
        p_t = xproj[:, t * Bp:(t + 1) * Bp]          # lane-aligned full-vreg slab
        # Layer 0: single dependent matmul per step (input term precomputed);
        # written as add-onto-matmul-result so v7x can fold it into the MRB.
        h0 = jnp.maximum(
            p_t + jnp.dot(whh0, h0, preferred_element_type=jnp.float32), 0.0)
        # Layer 1: two independent dots (no concat on the dependent chain).
        h1 = jnp.maximum(
            jnp.dot(wih1, h0, preferred_element_type=jnp.float32)
            + jnp.dot(whh1, h1, preferred_element_type=jnp.float32)
            + b1, 0.0)

    # fc(out[:, -1, :]) in column-major: (Cp, H) @ (H, Bp) -> (Cp, Bp).
    # Padded output rows are exactly zero (zero weight rows + zero bias rows).
    out_ref[...] = (jnp.dot(wfc, h1, preferred_element_type=jnp.float32)
                    + bfc).astype(out_ref.dtype)


def rnn_model_forward(x, params):
    (wih0, whh0, bih0, bhh0,
     wih1, whh1, bih1, bhh1,
     wfc, bfc) = params
    B, T, I = x.shape
    H = hidden_size
    C = num_classes

    # --- Plain-JAX layout plumbing (outside the kernel) ---------------------
    # x: (B, T, I) -> zero-pad batch to 128 lanes & input dim to 8 sublanes,
    # then column-major (Ip, T*Bp), T-major so step t is a contiguous lane block.
    xp = jnp.pad(x.astype(jnp.float32), ((0, _BP - B), (0, 0), (0, _IP - I)))
    x_cm = jnp.transpose(xp, (2, 1, 0)).reshape(_IP, T * _BP)

    # Pack every parameter (biases folded, fc padded) into one (8,128) slab.
    wih0_p = jnp.pad(wih0, ((0, 0), (0, _IP - I)))            # (H, 8)
    b0 = (bih0 + bhh0).reshape(H, 1)
    b1 = (bih1 + bhh1).reshape(H, 1)
    wfc_p = jnp.pad(wfc, ((0, _CP - C), (0, 0)))              # (8, H)
    bfc_p = jnp.pad(bfc, ((0, _CP - C),)).reshape(_CP, 1)
    slab = jnp.concatenate(
        [wih0_p, whh0, wih1, whh1, wfc_p, b0, b1, bfc_p,
         jnp.zeros((H, 128 - _SLAB_LANES), jnp.float32)], axis=1)  # (8, 128)

    vmem = pl.BlockSpec(memory_space=pltpu.MemorySpace.VMEM)
    out_full = pl.pallas_call(
        functools.partial(rnn_fc_kernel, T=T, Bp=_BP),
        out_shape=jax.ShapeDtypeStruct((_CP, _BP), jnp.float32),
        in_specs=[vmem, vmem],
        out_specs=vmem,
    )(x_cm, slab)

    # Drop the sublane/lane padding: (Cp, Bp) -> (B, C).
    return out_full[:C, :B].T


def rnn_model_reference(x, params):
    # Pure-JAX reference matching PyTorch nn.RNN(relu, batch_first=True) + Linear.
    (wih0, whh0, bih0, bhh0,
     wih1, whh1, bih1, bhh1,
     wfc, bfc) = params
    B, T, _ = x.shape
    h0 = jnp.zeros((B, hidden_size), jnp.float32)
    h1 = jnp.zeros((B, hidden_size), jnp.float32)
    for t in range(T):
        xt = x[:, t, :]
        h0 = jax.nn.relu(xt @ wih0.T + bih0 + h0 @ whh0.T + bhh0)
        h1 = jax.nn.relu(h0 @ wih1.T + bih1 + h1 @ whh1.T + bhh1)
    return h1 @ wfc.T + bfc


def init_params(key):
    # Deterministic init; PyTorch uses U(-1/sqrt(H), 1/sqrt(H)) for RNN & Linear.
    bound = 1.0 / jnp.sqrt(jnp.float32(hidden_size))
    ks = jax.random.split(key, 10)
    u = lambda k, shape: jax.random.uniform(k, shape, jnp.float32, -bound, bound)
    wih0 = u(ks[0], (hidden_size, input_size))
    whh0 = u(ks[1], (hidden_size, hidden_size))
    bih0 = u(ks[2], (hidden_size,))
    bhh0 = u(ks[3], (hidden_size,))
    wih1 = u(ks[4], (hidden_size, hidden_size))
    whh1 = u(ks[5], (hidden_size, hidden_size))
    bih1 = u(ks[6], (hidden_size,))
    bhh1 = u(ks[7], (hidden_size,))
    wfc = u(ks[8], (num_classes, hidden_size))
    bfc = u(ks[9], (num_classes,))
    return (wih0, whh0, bih0, bhh0, wih1, whh1, bih1, bhh1, wfc, bfc)


if __name__ == "__main__":
    key = jax.random.PRNGKey(0)
    k_x, k_p = jax.random.split(key)
    batch, seq = 2, 8
    x = jax.random.normal(k_x, (batch, seq, input_size), jnp.float32)
    params = init_params(k_p)

    out = rnn_model_forward(x, params)
    out = jax.block_until_ready(out)

    ref = rnn_model_reference(x, params)
    assert out.shape == (batch, num_classes)
    assert jnp.allclose(out, ref, atol=1e-5, rtol=1e-5), (out, ref)
    print("KERNEL_OK")
</pallas_src>

<mosaic_0001>
module attributes {stable_mosaic.version = 11 : i64} {
  func.func @rnn_fc_kernel(%arg0: memref<8x1024xf32, #tpu.memory_space<vmem>>, %arg1: memref<8x128xf32, #tpu.memory_space<vmem>>, %arg2: memref<8x128xf32, #tpu.memory_space<vmem>>) attributes {dimension_semantics = [], scalar_prefetch = 0 : i64, scratch_operands = 0 : i64, tpu.core_type = #tpu.core_type<tc>} {
    %c0 = arith.constant 0 : index
    %c0_0 = arith.constant 0 : index
    %0 = vector.load %arg1[%c0, %c0_0] : memref<8x128xf32, #tpu.memory_space<vmem>>, vector<8x128xf32>
    %1 = vector.extract_strided_slice %0 {offsets = [0, 0], sizes = [8, 8], strides = [1, 1]} : vector<8x128xf32> to vector<8x8xf32>
    %2 = vector.extract_strided_slice %0 {offsets = [0, 8], sizes = [8, 8], strides = [1, 1]} : vector<8x128xf32> to vector<8x8xf32>
    %3 = vector.extract_strided_slice %0 {offsets = [0, 16], sizes = [8, 8], strides = [1, 1]} : vector<8x128xf32> to vector<8x8xf32>
    %4 = vector.extract_strided_slice %0 {offsets = [0, 24], sizes = [8, 8], strides = [1, 1]} : vector<8x128xf32> to vector<8x8xf32>
    %5 = vector.extract_strided_slice %0 {offsets = [0, 32], sizes = [8, 8], strides = [1, 1]} : vector<8x128xf32> to vector<8x8xf32>
    %6 = vector.extract_strided_slice %0 {offsets = [0, 40], sizes = [8, 1], strides = [1, 1]} : vector<8x128xf32> to vector<8x1xf32>
    %7 = vector.extract_strided_slice %0 {offsets = [0, 41], sizes = [8, 1], strides = [1, 1]} : vector<8x128xf32> to vector<8x1xf32>
    %8 = vector.extract_strided_slice %0 {offsets = [0, 42], sizes = [8, 1], strides = [1, 1]} : vector<8x128xf32> to vector<8x1xf32>
    %c0_1 = arith.constant 0 : index
    %c0_2 = arith.constant 0 : index
    %9 = vector.load %arg0[%c0_1, %c0_2] : memref<8x1024xf32, #tpu.memory_space<vmem>>, vector<8x1024xf32>
    %cst = arith.constant dense<0.000000e+00> : vector<8x1024xf32>
    %10 = tpu.matmul %1, %9, %cst {dimension_numbers = #tpu.dot_dimension_numbers<[1], [0], [0], [1], [0, 0, 1, 1], [], []>} : vector<8x8xf32>, vector<8x1024xf32>, vector<8x1024xf32> -> vector<8x1024xf32>
    %11 = vector.broadcast %6 : vector<8x1xf32> to vector<8x1024xf32>
    %12 = arith.addf %10, %11 : vector<8x1024xf32>
    %cst_3 = arith.constant 0.000000e+00 : f32
    %13 = vector.broadcast %cst_3 : f32 to vector<8x128xf32>
    %cst_4 = arith.constant 0.000000e+00 : f32
    %14 = vector.broadcast %cst_4 : f32 to vector<8x128xf32>
    %15 = vector.extract_strided_slice %12 {offsets = [0, 0], sizes = [8, 128], strides = [1, 1]} : vector<8x1024xf32> to vector<8x128xf32>
    %cst_5 = arith.constant dense<0.000000e+00> : vector<8x128xf32>
    %16 = tpu.matmul %2, %13, %cst_5 {dimension_numbers = #tpu.dot_dimension_numbers<[1], [0], [0], [1], [0, 0, 1, 1], [], []>} : vector<8x8xf32>, vector<8x128xf32>, vector<8x128xf32> -> vector<8x128xf32>
    %17 = arith.addf %15, %16 : vector<8x128xf32>
    %cst_6 = arith.constant 0.000000e+00 : f32
    %18 = vector.broadcast %cst_6 : f32 to vector<8x128xf32>
    %19 = arith.maximumf %17, %18 : vector<8x128xf32>
    %cst_7 = arith.constant dense<0.000000e+00> : vector<8x128xf32>
    %20 = tpu.matmul %3, %19, %cst_7 {dimension_numbers = #tpu.dot_dimension_numbers<[1], [0], [0], [1], [0, 0, 1, 1], [], []>} : vector<8x8xf32>, vector<8x128xf32>, vector<8x128xf32> -> vector<8x128xf32>
    %cst_8 = arith.constant dense<0.000000e+00> : vector<8x128xf32>
    %21 = tpu.matmul %4, %14, %cst_8 {dimension_numbers = #tpu.dot_dimension_numbers<[1], [0], [0], [1], [0, 0, 1, 1], [], []>} : vector<8x8xf32>, vector<8x128xf32>, vector<8x128xf32> -> vector<8x128xf32>
    %22 = arith.addf %20, %21 : vector<8x128xf32>
    %23 = vector.broadcast %7 : vector<8x1xf32> to vector<8x128xf32>
    %24 = arith.addf %22, %23 : vector<8x128xf32>
    %cst_9 = arith.constant 0.000000e+00 : f32
    %25 = vector.broadcast %cst_9 : f32 to vector<8x128xf32>
    %26 = arith.maximumf %24, %25 : vector<8x128xf32>
    %27 = vector.extract_strided_slice %12 {offsets = [0, 128], sizes = [8, 128], strides = [1, 1]} : vector<8x1024xf32> to vector<8x128xf32>
    %cst_10 = arith.constant dense<0.000000e+00> : vector<8x128xf32>
    %28 = tpu.matmul %2, %19, %cst_10 {dimension_numbers = #tpu.dot_dimension_numbers<[1], [0], [0], [1], [0, 0, 1, 1], [], []>} : vector<8x8xf32>, vector<8x128xf32>, vector<8x128xf32> -> vector<8x128xf32>
    %29 = arith.addf %27, %28 : vector<8x128xf32>
    %cst_11 = arith.constant 0.000000e+00 : f32
    %30 = vector.broadcast %cst_11 : f32 to vector<8x128xf32>
    %31 = arith.maximumf %29, %30 : vector<8x128xf32>
    %cst_12 = arith.constant dense<0.000000e+00> : vector<8x128xf32>
    %32 = tpu.matmul %3, %31, %cst_12 {dimension_numbers = #tpu.dot_dimension_numbers<[1], [0], [0], [1], [0, 0, 1, 1], [], []>} : vector<8x8xf32>, vector<8x128xf32>, vector<8x128xf32> -> vector<8x128xf32>
    %cst_13 = arith.constant dense<0.000000e+00> : vector<8x128xf32>
    %33 = tpu.matmul %4, %26, %cst_13 {dimension_numbers = #tpu.dot_dimension_numbers<[1], [0], [0], [1], [0, 0, 1, 1], [], []>} : vector<8x8xf32>, vector<8x128xf32>, vector<8x128xf32> -> vector<8x128xf32>
    %34 = arith.addf %32, %33 : vector<8x128xf32>
    %35 = vector.broadcast %7 : vector<8x1xf32> to vector<8x128xf32>
    %36 = arith.addf %34, %35 : vector<8x128xf32>
    %cst_14 = arith.constant 0.000000e+00 : f32
    %37 = vector.broadcast %cst_14 : f32 to vector<8x128xf32>
    %38 = arith.maximumf %36, %37 : vector<8x128xf32>
    %39 = vector.extract_strided_slice %12 {offsets = [0, 256], sizes = [8, 128], strides = [1, 1]} : vector<8x1024xf32> to vector<8x128xf32>
    %cst_15 = arith.constant dense<0.000000e+00> : vector<8x128xf32>
    %40 = tpu.matmul %2, %31, %cst_15 {dimension_numbers = #tpu.dot_dimension_numbers<[1], [0], [0], [1], [0, 0, 1, 1], [], []>} : vector<8x8xf32>, vector<8x128xf32>, vector<8x128xf32> -> vector<8x128xf32>
    %41 = arith.addf %39, %40 : vector<8x128xf32>
    %cst_16 = arith.constant 0.000000e+00 : f32
    %42 = vector.broadcast %cst_16 : f32 to vector<8x128xf32>
    %43 = arith.maximumf %41, %42 : vector<8x128xf32>
    %cst_17 = arith.constant dense<0.000000e+00> : vector<8x128xf32>
    %44 = tpu.matmul %3, %43, %cst_17 {dimension_numbers = #tpu.dot_dimension_numbers<[1], [0], [0], [1], [0, 0, 1, 1], [], []>} : vector<8x8xf32>, vector<8x128xf32>, vector<8x128xf32> -> vector<8x128xf32>
    %cst_18 = arith.constant dense<0.000000e+00> : vector<8x128xf32>
    %45 = tpu.matmul %4, %38, %cst_18 {dimension_numbers = #tpu.dot_dimension_numbers<[1], [0], [0], [1], [0, 0, 1, 1], [], []>} : vector<8x8xf32>, vector<8x128xf32>, vector<8x128xf32> -> vector<8x128xf32>
    %46 = arith.addf %44, %45 : vector<8x128xf32>
    %47 = vector.broadcast %7 : vector<8x1xf32> to vector<8x128xf32>
    %48 = arith.addf %46, %47 : vector<8x128xf32>
    %cst_19 = arith.constant 0.000000e+00 : f32
    %49 = vector.broadcast %cst_19 : f32 to vector<8x128xf32>
    %50 = arith.maximumf %48, %49 : vector<8x128xf32>
    %51 = vector.extract_strided_slice %12 {offsets = [0, 384], sizes = [8, 128], strides = [1, 1]} : vector<8x1024xf32> to vector<8x128xf32>
    %cst_20 = arith.constant dense<0.000000e+00> : vector<8x128xf32>
    %52 = tpu.matmul %2, %43, %cst_20 {dimension_numbers = #tpu.dot_dimension_numbers<[1], [0], [0], [1], [0, 0, 1, 1], [], []>} : vector<8x8xf32>, vector<8x128xf32>, vector<8x128xf32> -> vector<8x128xf32>
    %53 = arith.addf %51, %52 : vector<8x128xf32>
    %cst_21 = arith.constant 0.000000e+00 : f32
    %54 = vector.broadcast %cst_21 : f32 to vector<8x128xf32>
    %55 = arith.maximumf %53, %54 : vector<8x128xf32>
    %cst_22 = arith.constant dense<0.000000e+00> : vector<8x128xf32>
    %56 = tpu.matmul %3, %55, %cst_22 {dimension_numbers = #tpu.dot_dimension_numbers<[1], [0], [0], [1], [0, 0, 1, 1], [], []>} : vector<8x8xf32>, vector<8x128xf32>, vector<8x128xf32> -> vector<8x128xf32>
    %cst_23 = arith.constant dense<0.000000e+00> : vector<8x128xf32>
    %57 = tpu.matmul %4, %50, %cst_23 {dimension_numbers = #tpu.dot_dimension_numbers<[1], [0], [0], [1], [0, 0, 1, 1], [], []>} : vector<8x8xf32>, vector<8x128xf32>, vector<8x128xf32> -> vector<8x128xf32>
    %58 = arith.addf %56, %57 : vector<8x128xf32>
    %59 = vector.broadcast %7 : vector<8x1xf32> to vector<8x128xf32>
    %60 = arith.addf %58, %59 : vector<8x128xf32>
    %cst_24 = arith.constant 0.000000e+00 : f32
    %61 = vector.broadcast %cst_24 : f32 to vector<8x128xf32>
    %62 = arith.maximumf %60, %61 : vector<8x128xf32>
    %63 = vector.extract_strided_slice %12 {offsets = [0, 512], sizes = [8, 128], strides = [1, 1]} : vector<8x1024xf32> to vector<8x128xf32>
    %cst_25 = arith.constant dense<0.000000e+00> : vector<8x128xf32>
    %64 = tpu.matmul %2, %55, %cst_25 {dimension_numbers = #tpu.dot_dimension_numbers<[1], [0], [0], [1], [0, 0, 1, 1], [], []>} : vector<8x8xf32>, vector<8x128xf32>, vector<8x128xf32> -> vector<8x128xf32>
    %65 = arith.addf %63, %64 : vector<8x128xf32>
    %cst_26 = arith.constant 0.000000e+00 : f32
    %66 = vector.broadcast %cst_26 : f32 to vector<8x128xf32>
    %67 = arith.maximumf %65, %66 : vector<8x128xf32>
    %cst_27 = arith.constant dense<0.000000e+00> : vector<8x128xf32>
    %68 = tpu.matmul %3, %67, %cst_27 {dimension_numbers = #tpu.dot_dimension_numbers<[1], [0], [0], [1], [0, 0, 1, 1], [], []>} : vector<8x8xf32>, vector<8x128xf32>, vector<8x128xf32> -> vector<8x128xf32>
    %cst_28 = arith.constant dense<0.000000e+00> : vector<8x128xf32>
    %69 = tpu.matmul %4, %62, %cst_28 {dimension_numbers = #tpu.dot_dimension_numbers<[1], [0], [0], [1], [0, 0, 1, 1], [], []>} : vector<8x8xf32>, vector<8x128xf32>, vector<8x128xf32> -> vector<8x128xf32>
    %70 = arith.addf %68, %69 : vector<8x128xf32>
    %71 = vector.broadcast %7 : vector<8x1xf32> to vector<8x128xf32>
    %72 = arith.addf %70, %71 : vector<8x128xf32>
    %cst_29 = arith.constant 0.000000e+00 : f32
    %73 = vector.broadcast %cst_29 : f32 to vector<8x128xf32>
    %74 = arith.maximumf %72, %73 : vector<8x128xf32>
    %75 = vector.extract_strided_slice %12 {offsets = [0, 640], sizes = [8, 128], strides = [1, 1]} : vector<8x1024xf32> to vector<8x128xf32>
    %cst_30 = arith.constant dense<0.000000e+00> : vector<8x128xf32>
    %76 = tpu.matmul %2, %67, %cst_30 {dimension_numbers = #tpu.dot_dimension_numbers<[1], [0], [0], [1], [0, 0, 1, 1], [], []>} : vector<8x8xf32>, vector<8x128xf32>, vector<8x128xf32> -> vector<8x128xf32>
    %77 = arith.addf %75, %76 : vector<8x128xf32>
    %cst_31 = arith.constant 0.000000e+00 : f32
    %78 = vector.broadcast %cst_31 : f32 to vector<8x128xf32>
    %79 = arith.maximumf %77, %78 : vector<8x128xf32>
    %cst_32 = arith.constant dense<0.000000e+00> : vector<8x128xf32>
    %80 = tpu.matmul %3, %79, %cst_32 {dimension_numbers = #tpu.dot_dimension_numbers<[1], [0], [0], [1], [0, 0, 1, 1], [], []>} : vector<8x8xf32>, vector<8x128xf32>, vector<8x128xf32> -> vector<8x128xf32>
    %cst_33 = arith.constant dense<0.000000e+00> : vector<8x128xf32>
    %81 = tpu.matmul %4, %74, %cst_33 {dimension_numbers = #tpu.dot_dimension_numbers<[1], [0], [0], [1], [0, 0, 1, 1], [], []>} : vector<8x8xf32>, vector<8x128xf32>, vector<8x128xf32> -> vector<8x128xf32>
    %82 = arith.addf %80, %81 : vector<8x128xf32>
    %83 = vector.broadcast %7 : vector<8x1xf32> to vector<8x128xf32>
    %84 = arith.addf %82, %83 : vector<8x128xf32>
    %cst_34 = arith.constant 0.000000e+00 : f32
    %85 = vector.broadcast %cst_34 : f32 to vector<8x128xf32>
    %86 = arith.maximumf %84, %85 : vector<8x128xf32>
    %87 = vector.extract_strided_slice %12 {offsets = [0, 768], sizes = [8, 128], strides = [1, 1]} : vector<8x1024xf32> to vector<8x128xf32>
    %cst_35 = arith.constant dense<0.000000e+00> : vector<8x128xf32>
    %88 = tpu.matmul %2, %79, %cst_35 {dimension_numbers = #tpu.dot_dimension_numbers<[1], [0], [0], [1], [0, 0, 1, 1], [], []>} : vector<8x8xf32>, vector<8x128xf32>, vector<8x128xf32> -> vector<8x128xf32>
    %89 = arith.addf %87, %88 : vector<8x128xf32>
    %cst_36 = arith.constant 0.000000e+00 : f32
    %90 = vector.broadcast %cst_36 : f32 to vector<8x128xf32>
    %91 = arith.maximumf %89, %90 : vector<8x128xf32>
    %cst_37 = arith.constant dense<0.000000e+00> : vector<8x128xf32>
    %92 = tpu.matmul %3, %91, %cst_37 {dimension_numbers = #tpu.dot_dimension_numbers<[1], [0], [0], [1], [0, 0, 1, 1], [], []>} : vector<8x8xf32>, vector<8x128xf32>, vector<8x128xf32> -> vector<8x128xf32>
    %cst_38 = arith.constant dense<0.000000e+00> : vector<8x128xf32>
    %93 = tpu.matmul %4, %86, %cst_38 {dimension_numbers = #tpu.dot_dimension_numbers<[1], [0], [0], [1], [0, 0, 1, 1], [], []>} : vector<8x8xf32>, vector<8x128xf32>, vector<8x128xf32> -> vector<8x128xf32>
    %94 = arith.addf %92, %93 : vector<8x128xf32>
    %95 = vector.broadcast %7 : vector<8x1xf32> to vector<8x128xf32>
    %96 = arith.addf %94, %95 : vector<8x128xf32>
    %cst_39 = arith.constant 0.000000e+00 : f32
    %97 = vector.broadcast %cst_39 : f32 to vector<8x128xf32>
    %98 = arith.maximumf %96, %97 : vector<8x128xf32>
    %99 = vector.extract_strided_slice %12 {offsets = [0, 896], sizes = [8, 128], strides = [1, 1]} : vector<8x1024xf32> to vector<8x128xf32>
    %cst_40 = arith.constant dense<0.000000e+00> : vector<8x128xf32>
    %100 = tpu.matmul %2, %91, %cst_40 {dimension_numbers = #tpu.dot_dimension_numbers<[1], [0], [0], [1], [0, 0, 1, 1], [], []>} : vector<8x8xf32>, vector<8x128xf32>, vector<8x128xf32> -> vector<8x128xf32>
    %101 = arith.addf %99, %100 : vector<8x128xf32>
    %cst_41 = arith.constant 0.000000e+00 : f32
    %102 = vector.broadcast %cst_41 : f32 to vector<8x128xf32>
    %103 = arith.maximumf %101, %102 : vector<8x128xf32>
    %cst_42 = arith.constant dense<0.000000e+00> : vector<8x128xf32>
    %104 = tpu.matmul %3, %103, %cst_42 {dimension_numbers = #tpu.dot_dimension_numbers<[1], [0], [0], [1], [0, 0, 1, 1], [], []>} : vector<8x8xf32>, vector<8x128xf32>, vector<8x128xf32> -> vector<8x128xf32>
    %cst_43 = arith.constant dense<0.000000e+00> : vector<8x128xf32>
    %105 = tpu.matmul %4, %98, %cst_43 {dimension_numbers = #tpu.dot_dimension_numbers<[1], [0], [0], [1], [0, 0, 1, 1], [], []>} : vector<8x8xf32>, vector<8x128xf32>, vector<8x128xf32> -> vector<8x128xf32>
    %106 = arith.addf %104, %105 : vector<8x128xf32>
    %107 = vector.broadcast %7 : vector<8x1xf32> to vector<8x128xf32>
    %108 = arith.addf %106, %107 : vector<8x128xf32>
    %cst_44 = arith.constant 0.000000e+00 : f32
    %109 = vector.broadcast %cst_44 : f32 to vector<8x128xf32>
    %110 = arith.maximumf %108, %109 : vector<8x128xf32>
    %cst_45 = arith.constant dense<0.000000e+00> : vector<8x128xf32>
    %111 = tpu.matmul %5, %110, %cst_45 {dimension_numbers = #tpu.dot_dimension_numbers<[1], [0], [0], [1], [0, 0, 1, 1], [], []>} : vector<8x8xf32>, vector<8x128xf32>, vector<8x128xf32> -> vector<8x128xf32>
    %112 = vector.broadcast %8 : vector<8x1xf32> to vector<8x128xf32>
    %113 = arith.addf %111, %112 : vector<8x128xf32>
    %c0_46 = arith.constant 0 : index
    %c0_47 = arith.constant 0 : index
    %114 = vector.load %arg2[%c0_46, %c0_47] : memref<8x128xf32, #tpu.memory_space<vmem>>, vector<8x128xf32>
    tpu.vector_store %arg2[%c0_46, %c0_47], %113 {strides = array<i32>} : memref<8x128xf32, #tpu.memory_space<vmem>>, vector<8x128xf32>,
    return
  }
}

</mosaic_0001>

<llo_original>
// kernel: tpu_custom_call.1
$region0: #{tpu_custom_call.1}
  #allocation0 [shape = 'u32[]', space=smem, size = 0x4, offset = 0x4, fixed_abs, tag = 'smem constant byte address 0x4 - core index']
  #allocation1 [shape = 'u32[144,128]{1,0:T(1,128)}', space=vmem, size = 0x12000, scoped, tag = 'internal scratch']
  %s0 = inlined_call_operand.hbm [shape: f32[8,1024], index: 0, kind: input, shape index: {}]
  %s1 = inlined_call_operand.hbm [shape: f32[8,128], index: 1, kind: input, shape index: {}]
  %s2 = inlined_call_operand.hbm [shape: f32[8,128], index: 2, kind: output, shape index: {}]
  %s3 = sld [smem:[#allocation0]]
  $region26: #{tpu_custom_call.1} parent=0
    _
  %s5 = ssub.s32 1, %s3
  %s6 = scalar_select 0, %s5, %s3
  $region1: #{tpu_custom_call.1} parent=0
    #allocation2 [shape = 'u8[32768]{0}', space=vmem, size = 0x8000, scoped, tag = 'input window, operand 0, single buffered']
    #allocation3 [shape = 's32[1]{0}', space=sflag, size = 0x4, scoped, tag = 'scoped memory for tpu_custom_call.1']
    #allocation4 [shape = 's32[1]{0}', space=sflag, size = 0x4, scoped, tag = 'scoped memory for tpu_custom_call.1']
    #allocation5 [shape = 'u8[4096]{0}', space=vmem, size = 0x1000, scoped, tag = 'input window, operand 1, single buffered']
    #allocation6 [shape = 's32[1]{0}', space=sflag, size = 0x4, scoped, tag = 'scoped memory for tpu_custom_call.1']
    #allocation7 [shape = 'u8[4096]{0}', space=vmem, size = 0x1000, scoped, tag = 'output window, operand 0, single buffered']
    %7 = vsyncpa [#allocation3], 0
    %8 = vsyncpa [#allocation6], 0
    %9 = vsyncpa [#allocation4], 0
    // Predicated region
    $region2: #{tpu_custom_call.1} parent=1 // pred_check
      _
    $region3: #{tpu_custom_call.1} parent=1 // pred_check_branch
      %11 = sbr.rel (0) target = $region5
    $region4: #{tpu_custom_call.1} parent=1 // pred_region
      %s13 = ssub.s32 1024, 1024
      %14 = vsyncadd [#allocation3], %s13
      %s16 = sshll.u32 [#allocation2], 4
      %s17 = int_to_ptr.vmem [resolvable:$true] %s16
      %19 = dma.hbm_to_vmem [thread:$0]  %s0, 1024, %s17, [#allocation3]
    $region5: #{tpu_custom_call.1} parent=1 // pred_fallthru
      _
    // Predicated region
    $region6: #{tpu_custom_call.1} parent=1 // pred_check
      _
    $region7: #{tpu_custom_call.1} parent=1 // pred_check_branch
      %21 = sbr.rel (0) target = $region9
    $region8: #{tpu_custom_call.1} parent=1 // pred_region
      %s23 = ssub.s32 128, 128
      %24 = vsyncadd [#allocation6], %s23
      %s26 = sshll.u32 [#allocation5], 4
      %s27 = int_to_ptr.vmem [resolvable:$true] %s26
      %29 = dma.hbm_to_vmem [thread:$0]  %s1, 128, %s27, [#allocation6]
    $region9: #{tpu_custom_call.1} parent=1 // pred_fallthru
      _
    // Predicated region
    $region10: #{tpu_custom_call.1} parent=1 // pred_check
      _
    $region11: #{tpu_custom_call.1} parent=1 // pred_check_branch
      %31 = sbr.rel (0) target = $region13
    $region12: #{tpu_custom_call.1} parent=1 // pred_region
      %32 = dma.done [#allocation3], 1024
    $region13: #{tpu_custom_call.1} parent=1 // pred_fallthru
      _
    // Predicated region
    $region14: #{tpu_custom_call.1} parent=1 // pred_check
      _
    $region15: #{tpu_custom_call.1} parent=1 // pred_check_branch
      %34 = sbr.rel (0) target = $region17
    $region16: #{tpu_custom_call.1} parent=1 // pred_region
      %35 = dma.done [#allocation6], 128
    $region17: #{tpu_custom_call.1} parent=1 // pred_fallthru
      _
    %v36 = vld [vmem:[#allocation5] sm:$0xff]
    %v37 = vld [vmem:[#allocation2] sm:$0xff]
    %v38 = vld [vmem:[#allocation2 + $0x8] sm:$0xff]
    %v39 = vld [vmem:[#allocation2 + $0x10] sm:$0xff]
    %v40 = vld [vmem:[#allocation2 + $0x18] sm:$0xff]
    %v41 = vld [vmem:[#allocation2 + $0x20] sm:$0xff]
    %v42 = vld [vmem:[#allocation2 + $0x28] sm:$0xff]
    %v43 = vld [vmem:[#allocation2 + $0x30] sm:$0xff]
    %v44 = vld [vmem:[#allocation2 + $0x38] sm:$0xff]
    %46 = vset.pattern.permute.xlu0 40
    %47 = vperm.xlu0 %46, %v36
    %v48 = vpop.permute.xlu0 %47
    %vm50 = vcmask 64512
    %v51 = vsel %vm50, %v36, 0
    %53 = vmatprep.subr.mxu0 %v38
    %54 = vmatpush1.msra.mxu0 %v37
    %55 = vmatprep.subr.mxu0 0.0
    %56 = vmatpush1.msra.mxu0 0.0
    %57 = vmatprep.subr.mxu0 0.0
    %58 = vmatpush1.msra.mxu0 0.0
    %59 = vmatprep.subr.mxu0 0.0
    %60 = vmatpush1.msra.mxu0 0.0
    %61 = vmatprep.subr.mxu0 0.0
    %62 = vmatpush1.msra.mxu0 0.0
    %63 = vmatprep.subr.mxu0 0.0
    %64 = vmatpush1.msra.mxu0 0.0
    %65 = vmatprep.subr.mxu0 0.0
    %66 = vmatpush1.msra.mxu0 0.0
    %67 = vmatprep.subr.mxu0 0.0
    %68 = vmatpush1.msra.mxu0 0.0
    %69 = vmatprep.subr.mxu0 0.0
    %70 = vmatpush1.msra.mxu0 0.0
    %71 = vmatprep.subr.mxu0 0.0
    %72 = vmatpush1.msra.mxu0 0.0
    %73 = vmatprep.subr.mxu0 0.0
    %74 = vmatpush1.msra.mxu0 0.0
    %75 = vmatprep.subr.mxu0 0.0
    %76 = vmatpush1.msra.mxu0 0.0
    %77 = vmatprep.subr.mxu0 0.0
    %78 = vmatpush1.msra.mxu0 0.0
    %79 = vmatprep.subr.mxu0 0.0
    %80 = vmatpush1.msra.mxu0 0.0
    %81 = vmatprep.subr.mxu0 0.0
    %82 = vmatpush1.msra.mxu0 0.0
    %83 = vmatprep.subr.mxu0 0.0
    %84 = vmatpush1.msra.mxu0 0.0
    %85 = vmatprep.subr.mxu0 0.0
    %86 = vmatpush1.msra.mxu0 0.0
    %87 = vmatprep.subr.mxu0 0.0
    %88 = vmatpush1.msra.mxu0 0.0
    %89 = vmatprep.subr.mxu0 0.0
    %90 = vmatpush1.msra.mxu0 0.0
    %91 = vmatprep.subr.mxu0 0.0
    %92 = vmatpush1.msra.mxu0 0.0
    %93 = vmatprep.subr.mxu0 0.0
    %94 = vmatpush1.msra.mxu0 0.0
    %95 = vmatprep.subr.mxu0 0.0
    %96 = vmatpush1.msra.mxu0 0.0
    %97 = vmatprep.subr.mxu0 0.0
    %98 = vmatpush1.msra.mxu0 0.0
    %99 = vmatprep.subr.mxu0 0.0
    %100 = vmatpush1.msra.mxu0 0.0
    %101 = vmatprep.subr.mxu0 0.0
    %102 = vmatpush1.msra.mxu0 0.0
    %103 = vmatprep.subr.mxu0 0.0
    %104 = vmatpush1.msra.mxu0 0.0
    %105 = vmatprep.subr.mxu0 0.0
    %106 = vmatpush1.msra.mxu0 0.0
    %107 = vmatprep.subr.mxu0 0.0
    %108 = vmatpush1.msra.mxu0 0.0
    %109 = vmatprep.subr.mxu0 0.0
    %110 = vmatpush1.msra.mxu0 0.0
    %111 = vmatprep.subr.mxu0 0.0
    %112 = vmatpush1.msra.mxu0 0.0
    %113 = vmatprep.subr.mxu0 0.0
    %114 = vmatpush1.msra.mxu0 0.0
    %115 = vmatprep.subr.mxu0 0.0
    %116 = vmatpush1.msra.mxu0 0.0
    %117 = vmatprep.mubr.f32.mxu0 0.0
    %118 = vmatmul.mubr.f32.gmra.mrb[0].mxu0 %v51
    %v119 = vpop.f32.mrb[0].mxu0
    %v120 = vadd.f32 %v48, %v119
    %v121 = vpop.f32.mrb[0].mxu0
    %v122 = vadd.f32 %v48, %v121
    %123 = vdwg.mxu0
    %124 = vmatprep.subr.mxu0 %v40
    %125 = vmatpush1.msra.mxu0 %v39
    %126 = vmatprep.subr.mxu0 0.0
    %127 = vmatpush1.msra.mxu0 0.0
    %128 = vmatprep.subr.mxu0 0.0
    %129 = vmatpush1.msra.mxu0 0.0
    %130 = vmatprep.subr.mxu0 0.0
    %131 = vmatpush1.msra.mxu0 0.0
    %132 = vmatprep.subr.mxu0 0.0
    %133 = vmatpush1.msra.mxu0 0.0
    %134 = vmatprep.subr.mxu0 0.0
    %135 = vmatpush1.msra.mxu0 0.0
    %136 = vmatprep.subr.mxu0 0.0
    %137 = vmatpush1.msra.mxu0 0.0
    %138 = vmatprep.subr.mxu0 0.0
    %139 = vmatpush1.msra.mxu0 0.0
    %140 = vmatprep.subr.mxu0 0.0
    %141 = vmatpush1.msra.mxu0 0.0
    %142 = vmatprep.subr.mxu0 0.0
    %143 = vmatpush1.msra.mxu0 0.0
    %144 = vmatprep.subr.mxu0 0.0
    %145 = vmatpush1.msra.mxu0 0.0
    %146 = vmatprep.subr.mxu0 0.0
    %147 = vmatpush1.msra.mxu0 0.0
    %148 = vmatprep.subr.mxu0 0.0
    %149 = vmatpush1.msra.mxu0 0.0
    %150 = vmatprep.subr.mxu0 0.0
    %151 = vmatpush1.msra.mxu0 0.0
    %152 = vmatprep.subr.mxu0 0.0
    %153 = vmatpush1.msra.mxu0 0.0
    %154 = vmatprep.subr.mxu0 0.0
    %155 = vmatpush1.msra.mxu0 0.0
    %156 = vmatprep.subr.mxu0 0.0
    %157 = vmatpush1.msra.mxu0 0.0
    %158 = vmatprep.subr.mxu0 0.0
    %159 = vmatpush1.msra.mxu0 0.0
    %160 = vmatprep.subr.mxu0 0.0
    %161 = vmatpush1.msra.mxu0 0.0
    %162 = vmatprep.subr.mxu0 0.0
    %163 = vmatpush1.msra.mxu0 0.0
    %164 = vmatprep.subr.mxu0 0.0
    %165 = vmatpush1.msra.mxu0 0.0
    %166 = vmatprep.subr.mxu0 0.0
    %167 = vmatpush1.msra.mxu0 0.0
    %168 = vmatprep.subr.mxu0 0.0
    %169 = vmatpush1.msra.mxu0 0.0
    %170 = vmatprep.subr.mxu0 0.0
    %171 = vmatpush1.msra.mxu0 0.0
    %172 = vmatprep.subr.mxu0 0.0
    %173 = vmatpush1.msra.mxu0 0.0
    %174 = vmatprep.subr.mxu0 0.0
    %175 = vmatpush1.msra.mxu0 0.0
    %176 = vmatprep.subr.mxu0 0.0
    %177 = vmatpush1.msra.mxu0 0.0
    %178 = vmatprep.subr.mxu0 0.0
    %179 = vmatpush1.msra.mxu0 0.0
    %180 = vmatprep.subr.mxu0 0.0
    %181 = vmatpush1.msra.mxu0 0.0
    %182 = vmatprep.subr.mxu0 0.0
    %183 = vmatpush1.msra.mxu0 0.0
    %184 = vmatprep.subr.mxu0 0.0
    %185 = vmatpush1.msra.mxu0 0.0
    %186 = vmatprep.subr.mxu0 0.0
    %187 = vmatpush1.msra.mxu0 0.0
    %188 = vmatprep.mubr.f32.mxu0 0.0
    %189 = vmatmul.mubr.f32.gmra.mrb[0].mxu0 %v51
    %v190 = vpop.f32.mrb[0].mxu0
    %v191 = vadd.f32 %v48, %v190
    %v192 = vpop.f32.mrb[0].mxu0
    %v193 = vadd.f32 %v48, %v192
    %194 = vdwg.mxu0
    %195 = vmatprep.subr.mxu0 %v42
    %196 = vmatpush1.msra.mxu0 %v41
    %197 = vmatprep.subr.mxu0 0.0
    %198 = vmatpush1.msra.mxu0 0.0
    %199 = vmatprep.subr.mxu0 0.0
    %200 = vmatpush1.msra.mxu0 0.0
    %201 = vmatprep.subr.mxu0 0.0
    %202 = vmatpush1.msra.mxu0 0.0
    %203 = vmatprep.subr.mxu0 0.0
    %204 = vmatpush1.msra.mxu0 0.0
    %205 = vmatprep.subr.mxu0 0.0
    %206 = vmatpush1.msra.mxu0 0.0
    %207 = vmatprep.subr.mxu0 0.0
    %208 = vmatpush1.msra.mxu0 0.0
    %209 = vmatprep.subr.mxu0 0.0
    %210 = vmatpush1.msra.mxu0 0.0
    %211 = vmatprep.subr.mxu0 0.0
    %212 = vmatpush1.msra.mxu0 0.0
    %213 = vmatprep.subr.mxu0 0.0
    %214 = vmatpush1.msra.mxu0 0.0
    %215 = vmatprep.subr.mxu0 0.0
    %216 = vmatpush1.msra.mxu0 0.0
    %217 = vmatprep.subr.mxu0 0.0
    %218 = vmatpush1.msra.mxu0 0.0
    %219 = vmatprep.subr.mxu0 0.0
    %220 = vmatpush1.msra.mxu0 0.0
    %221 = vmatprep.subr.mxu0 0.0
    %222 = vmatpush1.msra.mxu0 0.0
    %223 = vmatprep.subr.mxu0 0.0
    %224 = vmatpush1.msra.mxu0 0.0
    %225 = vmatprep.subr.mxu0 0.0
    %226 = vmatpush1.msra.mxu0 0.0
    %227 = vmatprep.subr.mxu0 0.0
    %228 = vmatpush1.msra.mxu0 0.0
    %229 = vmatprep.subr.mxu0 0.0
    %230 = vmatpush1.msra.mxu0 0.0
    %231 = vmatprep.subr.mxu0 0.0
    %232 = vmatpush1.msra.mxu0 0.0
    %233 = vmatprep.subr.mxu0 0.0
    %234 = vmatpush1.msra.mxu0 0.0
    %235 = vmatprep.subr.mxu0 0.0
    %236 = vmatpush1.msra.mxu0 0.0
    %237 = vmatprep.subr.mxu0 0.0
    %238 = vmatpush1.msra.mxu0 0.0
    %239 = vmatprep.subr.mxu0 0.0
    %240 = vmatpush1.msra.mxu0 0.0
    %241 = vmatprep.subr.mxu0 0.0
    %242 = vmatpush1.msra.mxu0 0.0
    %243 = vmatprep.subr.mxu0 0.0
    %244 = vmatpush1.msra.mxu0 0.0
    %245 = vmatprep.subr.mxu0 0.0
    %246 = vmatpush1.msra.mxu0 0.0
    %247 = vmatprep.subr.mxu0 0.0
    %248 = vmatpush1.msra.mxu0 0.0
    %249 = vmatprep.subr.mxu0 0.0
    %250 = vmatpush1.msra.mxu0 0.0
    %251 = vmatprep.subr.mxu0 0.0
    %252 = vmatpush1.msra.mxu0 0.0
    %253 = vmatprep.subr.mxu0 0.0
    %254 = vmatpush1.msra.mxu0 0.0
    %255 = vmatprep.subr.mxu0 0.0
    %256 = vmatpush1.msra.mxu0 0.0
    %257 = vmatprep.subr.mxu0 0.0
    %258 = vmatpush1.msra.mxu0 0.0
    %259 = vmatprep.mubr.f32.mxu0 0.0
    %260 = vmatmul.mubr.f32.gmra.mrb[0].mxu0 %v51
    %v261 = vpop.f32.mrb[0].mxu0
    %v262 = vadd.f32 %v48, %v261
    %v263 = vpop.f32.mrb[0].mxu0
    %v264 = vadd.f32 %v48, %v263
    %265 = vdwg.mxu0
    %266 = vmatprep.subr.mxu0 %v44
    %267 = vmatpush1.msra.mxu0 %v43
    %268 = vmatprep.subr.mxu0 0.0
    %269 = vmatpush1.msra.mxu0 0.0
    %270 = vmatprep.subr.mxu0 0.0
    %271 = vmatpush1.msra.mxu0 0.0
    %272 = vmatprep.subr.mxu0 0.0
    %273 = vmatpush1.msra.mxu0 0.0
    %274 = vmatprep.subr.mxu0 0.0
    %275 = vmatpush1.msra.mxu0 0.0
    %276 = vmatprep.subr.mxu0 0.0
    %277 = vmatpush1.msra.mxu0 0.0
    %278 = vmatprep.subr.mxu0 0.0
    %279 = vmatpush1.msra.mxu0 0.0
    %280 = vmatprep.subr.mxu0 0.0
    %281 = vmatpush1.msra.mxu0 0.0
    %282 = vmatprep.subr.mxu0 0.0
    %283 = vmatpush1.msra.mxu0 0.0
    %284 = vmatprep.subr.mxu0 0.0
    %285 = vmatpush1.msra.mxu0 0.0
    %286 = vmatprep.subr.mxu0 0.0
    %287 = vmatpush1.msra.mxu0 0.0
    %288 = vmatprep.subr.mxu0 0.0
    %289 = vmatpush1.msra.mxu0 0.0
    %290 = vmatprep.subr.mxu0 0.0
    %291 = vmatpush1.msra.mxu0 0.0
    %292 = vmatprep.subr.mxu0 0.0
    %293 = vmatpush1.msra.mxu0 0.0
    %294 = vmatprep.subr.mxu0 0.0
    %295 = vmatpush1.msra.mxu0 0.0
    %296 = vmatprep.subr.mxu0 0.0
    %297 = vmatpush1.msra.mxu0 0.0
    %298 = vmatprep.subr.mxu0 0.0
    %299 = vmatpush1.msra.mxu0 0.0
    %300 = vmatprep.subr.mxu0 0.0
    %301 = vmatpush1.msra.mxu0 0.0
    %302 = vmatprep.subr.mxu0 0.0
    %303 = vmatpush1.msra.mxu0 0.0
    %304 = vmatprep.subr.mxu0 0.0
    %305 = vmatpush1.msra.mxu0 0.0
    %306 = vmatprep.subr.mxu0 0.0
    %307 = vmatpush1.msra.mxu0 0.0
    %308 = vmatprep.subr.mxu0 0.0
    %309 = vmatpush1.msra.mxu0 0.0
    %310 = vmatprep.subr.mxu0 0.0
    %311 = vmatpush1.msra.mxu0 0.0
    %312 = vmatprep.subr.mxu0 0.0
    %313 = vmatpush1.msra.mxu0 0.0
    %314 = vmatprep.subr.mxu0 0.0
    %315 = vmatpush1.msra.mxu0 0.0
    %316 = vmatprep.subr.mxu0 0.0
    %317 = vmatpush1.msra.mxu0 0.0
    %318 = vmatprep.subr.mxu0 0.0
    %319 = vmatpush1.msra.mxu0 0.0
    %320 = vmatprep.subr.mxu0 0.0
    %321 = vmatpush1.msra.mxu0 0.0
    %322 = vmatprep.subr.mxu0 0.0
    %323 = vmatpush1.msra.mxu0 0.0
    %324 = vmatprep.subr.mxu0 0.0
    %325 = vmatpush1.msra.mxu0 0.0
    %326 = vmatprep.subr.mxu0 0.0
    %327 = vmatpush1.msra.mxu0 0.0
    %328 = vmatprep.subr.mxu0 0.0
    %329 = vmatpush1.msra.mxu0 0.0
    %330 = vmatprep.mubr.f32.mxu0 0.0
    %331 = vmatmul.mubr.f32.gmra.mrb[0].mxu0 %v51
    %v332 = vpop.f32.mrb[0].mxu0
    %v333 = vadd.f32 %v48, %v332
    %v334 = vpop.f32.mrb[0].mxu0
    %v335 = vadd.f32 %v48, %v334
    %336 = vdwg.mxu0
    %337 = vrot.lane.b32.xlu0 %v36, 120
    %v338 = vpop.permute.xlu0 %337
    %v339 = vsel %vm50, %v338, 0
    %341 = vmatprep.subr.mxu0 0.0
    %342 = vmatpush1.msra.mxu0 0.0
    %343 = vmatprep.subr.mxu0 0.0
    %344 = vmatpush1.msra.mxu0 0.0
    %345 = vmatprep.subr.mxu0 0.0
    %346 = vmatpush1.msra.mxu0 0.0
    %347 = vmatprep.subr.mxu0 0.0
    %348 = vmatpush1.msra.mxu0 0.0
    %349 = vmatprep.subr.mxu0 0.0
    %350 = vmatpush1.msra.mxu0 0.0
    %351 = vmatprep.subr.mxu0 0.0
    %352 = vmatpush1.msra.mxu0 0.0
    %353 = vmatprep.subr.mxu0 0.0
    %354 = vmatpush1.msra.mxu0 0.0
    %355 = vmatprep.subr.mxu0 0.0
    %356 = vmatpush1.msra.mxu0 0.0
    %357 = vmatprep.subr.mxu0 0.0
    %358 = vmatpush1.msra.mxu0 0.0
    %359 = vmatprep.subr.mxu0 0.0
    %360 = vmatpush1.msra.mxu0 0.0
    %361 = vmatprep.subr.mxu0 0.0
    %362 = vmatpush1.msra.mxu0 0.0
    %363 = vmatprep.subr.mxu0 0.0
    %364 = vmatpush1.msra.mxu0 0.0
    %365 = vmatprep.subr.mxu0 0.0
    %366 = vmatpush1.msra.mxu0 0.0
    %367 = vmatprep.subr.mxu0 0.0
    %368 = vmatpush1.msra.mxu0 0.0
    %369 = vmatprep.subr.mxu0 0.0
    %370 = vmatpush1.msra.mxu0 0.0
    %371 = vmatprep.subr.mxu0 0.0
    %372 = vmatpush1.msra.mxu0 0.0
    %373 = vmatprep.subr.mxu0 0.0
    %374 = vmatpush1.msra.mxu0 0.0
    %375 = vmatprep.subr.mxu0 0.0
    %376 = vmatpush1.msra.mxu0 0.0
    %377 = vmatprep.subr.mxu0 0.0
    %378 = vmatpush1.msra.mxu0 0.0
    %379 = vmatprep.subr.mxu0 0.0
    %380 = vmatpush1.msra.mxu0 0.0
    %381 = vmatprep.subr.mxu0 0.0
    %382 = vmatpush1.msra.mxu0 0.0
    %383 = vmatprep.subr.mxu0 0.0
    %384 = vmatpush1.msra.mxu0 0.0
    %385 = vmatprep.subr.mxu0 0.0
    %386 = vmatpush1.msra.mxu0 0.0
    %387 = vmatprep.subr.mxu0 0.0
    %388 = vmatpush1.msra.mxu0 0.0
    %389 = vmatprep.subr.mxu0 0.0
    %390 = vmatpush1.msra.mxu0 0.0
    %391 = vmatprep.subr.mxu0 0.0
    %392 = vmatpush1.msra.mxu0 0.0
    %393 = vmatprep.subr.mxu0 0.0
    %394 = vmatpush1.msra.mxu0 0.0
    %395 = vmatprep.subr.mxu0 0.0
    %396 = vmatpush1.msra.mxu0 0.0
    %397 = vmatprep.subr.mxu0 0.0
    %398 = vmatpush1.msra.mxu0 0.0
    %399 = vmatprep.subr.mxu0 0.0
    %400 = vmatpush1.msra.mxu0 0.0
    %401 = vmatprep.subr.mxu0 0.0
    %402 = vmatpush1.msra.mxu0 0.0
    %403 = vmatprep.subr.mxu0 0.0
    %404 = vmatpush1.msra.mxu0 0.0
    %405 = vmatprep.mubr.f32.mxu0 0.0
    %406 = vmatmul.mubr.f32.gmra.mrb[0].mxu0 %v339
    %v407 = vpop.f32.mrb[0].mxu0
    %v408 = vadd.f32 0.0, %v407
    %v409 = vpop.f32.mrb[0].mxu0
    %410 = vdwg.mxu0
    %v411 = vadd.f32 %v120, %v408
    %v412 = vmax.f32 %v411, 0.0
    %413 = vrot.lane.b32.xlu0 %v36, 104
    %v414 = vpop.permute.xlu0 %413
    %v415 = vsel %vm50, %v414, 0
    %417 = vmatprep.subr.mxu0 0.0
    %418 = vmatpush1.msra.mxu0 0.0
    %419 = vmatprep.subr.mxu0 0.0
    %420 = vmatpush1.msra.mxu0 0.0
    %421 = vmatprep.subr.mxu0 0.0
    %422 = vmatpush1.msra.mxu0 0.0
    %423 = vmatprep.subr.mxu0 0.0
    %424 = vmatpush1.msra.mxu0 0.0
    %425 = vmatprep.subr.mxu0 0.0
    %426 = vmatpush1.msra.mxu0 0.0
    %427 = vmatprep.subr.mxu0 0.0
    %428 = vmatpush1.msra.mxu0 0.0
    %429 = vmatprep.subr.mxu0 0.0
    %430 = vmatpush1.msra.mxu0 0.0
    %431 = vmatprep.subr.mxu0 0.0
    %432 = vmatpush1.msra.mxu0 0.0
    %433 = vmatprep.subr.mxu0 0.0
    %434 = vmatpush1.msra.mxu0 0.0
    %435 = vmatprep.subr.mxu0 0.0
    %436 = vmatpush1.msra.mxu0 0.0
    %437 = vmatprep.subr.mxu0 0.0
    %438 = vmatpush1.msra.mxu0 0.0
    %439 = vmatprep.subr.mxu0 0.0
    %440 = vmatpush1.msra.mxu0 0.0
    %441 = vmatprep.subr.mxu0 0.0
    %442 = vmatpush1.msra.mxu0 0.0
    %443 = vmatprep.subr.mxu0 0.0
    %444 = vmatpush1.msra.mxu0 0.0
    %445 = vmatprep.subr.mxu0 0.0
    %446 = vmatpush1.msra.mxu0 0.0
    %447 = vmatprep.subr.mxu0 0.0
    %448 = vmatpush1.msra.mxu0 0.0
    %449 = vmatprep.subr.mxu0 0.0
    %450 = vmatpush1.msra.mxu0 0.0
    %451 = vmatprep.subr.mxu0 0.0
    %452 = vmatpush1.msra.mxu0 0.0
    %453 = vmatprep.subr.mxu0 0.0
    %454 = vmatpush1.msra.mxu0 0.0
    %455 = vmatprep.subr.mxu0 0.0
    %456 = vmatpush1.msra.mxu0 0.0
    %457 = vmatprep.subr.mxu0 0.0
    %458 = vmatpush1.msra.mxu0 0.0
    %459 = vmatprep.subr.mxu0 0.0
    %460 = vmatpush1.msra.mxu0 0.0
    %461 = vmatprep.subr.mxu0 0.0
    %462 = vmatpush1.msra.mxu0 0.0
    %463 = vmatprep.subr.mxu0 0.0
    %464 = vmatpush1.msra.mxu0 0.0
    %465 = vmatprep.subr.mxu0 0.0
    %466 = vmatpush1.msra.mxu0 0.0
    %467 = vmatprep.subr.mxu0 0.0
    %468 = vmatpush1.msra.mxu0 0.0
    %469 = vmatprep.subr.mxu0 0.0
    %470 = vmatpush1.msra.mxu0 0.0
    %471 = vmatprep.subr.mxu0 0.0
    %472 = vmatpush1.msra.mxu0 0.0
    %473 = vmatprep.subr.mxu0 0.0
    %474 = vmatpush1.msra.mxu0 0.0
    %475 = vmatprep.subr.mxu0 0.0
    %476 = vmatpush1.msra.mxu0 0.0
    %477 = vmatprep.subr.mxu0 0.0
    %478 = vmatpush1.msra.mxu0 0.0
    %479 = vmatprep.subr.mxu0 0.0
    %480 = vmatpush1.msra.mxu0 0.0
    %481 = vmatprep.mubr.f32.mxu0 0.0
    %482 = vmatmul.mubr.f32.gmra.mrb[0].mxu0 %v415
    %v483 = vpop.f32.mrb[0].mxu0
    %v484 = vadd.f32 0.0, %v483
    %v485 = vpop.f32.mrb[0].mxu0
    %486 = vdwg.mxu0
    %487 = vrot.lane.b32.xlu0 %v36, 112
    %v488 = vpop.permute.xlu0 %487
    %v489 = vsel %vm50, %v488, 0
    %491 = vmatprep.subr.mxu0 0.0
    %492 = vmatpush1.msra.mxu0 %v412
    %493 = vmatprep.subr.mxu0 0.0
    %494 = vmatpush1.msra.mxu0 0.0
    %495 = vmatprep.subr.mxu0 0.0
    %496 = vmatpush1.msra.mxu0 0.0
    %497 = vmatprep.subr.mxu0 0.0
    %498 = vmatpush1.msra.mxu0 0.0
    %499 = vmatprep.subr.mxu0 0.0
    %500 = vmatpush1.msra.mxu0 0.0
    %501 = vmatprep.subr.mxu0 0.0
    %502 = vmatpush1.msra.mxu0 0.0
    %503 = vmatprep.subr.mxu0 0.0
    %504 = vmatpush1.msra.mxu0 0.0
    %505 = vmatprep.subr.mxu0 0.0
    %506 = vmatpush1.msra.mxu0 0.0
    %507 = vmatprep.subr.mxu0 0.0
    %508 = vmatpush1.msra.mxu0 0.0
    %509 = vmatprep.subr.mxu0 0.0
    %510 = vmatpush1.msra.mxu0 0.0
    %511 = vmatprep.subr.mxu0 0.0
    %512 = vmatpush1.msra.mxu0 0.0
    %513 = vmatprep.subr.mxu0 0.0
    %514 = vmatpush1.msra.mxu0 0.0
    %515 = vmatprep.subr.mxu0 0.0
    %516 = vmatpush1.msra.mxu0 0.0
    %517 = vmatprep.subr.mxu0 0.0
    %518 = vmatpush1.msra.mxu0 0.0
    %519 = vmatprep.subr.mxu0 0.0
    %520 = vmatpush1.msra.mxu0 0.0
    %521 = vmatprep.subr.mxu0 0.0
    %522 = vmatpush1.msra.mxu0 0.0
    %523 = vmatprep.subr.mxu0 0.0
    %524 = vmatpush1.msra.mxu0 0.0
    %525 = vmatprep.subr.mxu0 0.0
    %526 = vmatpush1.msra.mxu0 0.0
    %527 = vmatprep.subr.mxu0 0.0
    %528 = vmatpush1.msra.mxu0 0.0
    %529 = vmatprep.subr.mxu0 0.0
    %530 = vmatpush1.msra.mxu0 0.0
    %531 = vmatprep.subr.mxu0 0.0
    %532 = vmatpush1.msra.mxu0 0.0
    %533 = vmatprep.subr.mxu0 0.0
    %534 = vmatpush1.msra.mxu0 0.0
    %535 = vmatprep.subr.mxu0 0.0
    %536 = vmatpush1.msra.mxu0 0.0
    %537 = vmatprep.subr.mxu0 0.0
    %538 = vmatpush1.msra.mxu0 0.0
    %539 = vmatprep.subr.mxu0 0.0
    %540 = vmatpush1.msra.mxu0 0.0
    %541 = vmatprep.subr.mxu0 0.0
    %542 = vmatpush1.msra.mxu0 0.0
    %543 = vmatprep.subr.mxu0 0.0
    %544 = vmatpush1.msra.mxu0 0.0
    %545 = vmatprep.subr.mxu0 0.0
    %546 = vmatpush1.msra.mxu0 0.0
    %547 = vmatprep.subr.mxu0 0.0
    %548 = vmatpush1.msra.mxu0 0.0
    %549 = vmatprep.subr.mxu0 0.0
    %550 = vmatpush1.msra.mxu0 0.0
    %551 = vmatprep.subr.mxu0 0.0
    %552 = vmatpush1.msra.mxu0 0.0
    %553 = vmatprep.subr.mxu0 0.0
    %554 = vmatpush1.msra.mxu0 0.0
    %555 = vmatprep.mubr.f32.mxu0 0.0
    %556 = vmatmul.mubr.f32.gmra.mrb[0].mxu0 %v489
    %v557 = vpop.f32.mrb[0].mxu0
    %v558 = vadd.f32 %v484, %v557
    %v559 = vpop.f32.mrb[0].mxu0
    %560 = vdwg.mxu0
    %561 = vset.pattern.permute.xlu0 41
    %562 = vperm.xlu0 %561, %v36
    %v563 = vpop.permute.xlu0 %562
    %v565 = vadd.f32 %v558, %v563
    %v566 = vmax.f32 %v565, 0.0
    %567 = vmatprep.subr.mxu0 0.0
    %568 = vmatpush1.msra.mxu0 %v412
    %569 = vmatprep.subr.mxu0 0.0
    %570 = vmatpush1.msra.mxu0 0.0
    %571 = vmatprep.subr.mxu0 0.0
    %572 = vmatpush1.msra.mxu0 0.0
    %573 = vmatprep.subr.mxu0 0.0
    %574 = vmatpush1.msra.mxu0 0.0
    %575 = vmatprep.subr.mxu0 0.0
    %576 = vmatpush1.msra.mxu0 0.0
    %577 = vmatprep.subr.mxu0 0.0
    %578 = vmatpush1.msra.mxu0 0.0
    %579 = vmatprep.subr.mxu0 0.0
    %580 = vmatpush1.msra.mxu0 0.0
    %581 = vmatprep.subr.mxu0 0.0
    %582 = vmatpush1.msra.mxu0 0.0
    %583 = vmatprep.subr.mxu0 0.0
    %584 = vmatpush1.msra.mxu0 0.0
    %585 = vmatprep.subr.mxu0 0.0
    %586 = vmatpush1.msra.mxu0 0.0
    %587 = vmatprep.subr.mxu0 0.0
    %588 = vmatpush1.msra.mxu0 0.0
    %589 = vmatprep.subr.mxu0 0.0
    %590 = vmatpush1.msra.mxu0 0.0
    %591 = vmatprep.subr.mxu0 0.0
    %592 = vmatpush1.msra.mxu0 0.0
    %593 = vmatprep.subr.mxu0 0.0
    %594 = vmatpush1.msra.mxu0 0.0
    %595 = vmatprep.subr.mxu0 0.0
    %596 = vmatpush1.msra.mxu0 0.0
    %597 = vmatprep.subr.mxu0 0.0
    %598 = vmatpush1.msra.mxu0 0.0
    %599 = vmatprep.subr.mxu0 0.0
    %600 = vmatpush1.msra.mxu0 0.0
    %601 = vmatprep.subr.mxu0 0.0
    %602 = vmatpush1.msra.mxu0 0.0
    %603 = vmatprep.subr.mxu0 0.0
    %604 = vmatpush1.msra.mxu0 0.0
    %605 = vmatprep.subr.mxu0 0.0
    %606 = vmatpush1.msra.mxu0 0.0
    %607 = vmatprep.subr.mxu0 0.0
    %608 = vmatpush1.msra.mxu0 0.0
    %609 = vmatprep.subr.mxu0 0.0
    %610 = vmatpush1.msra.mxu0 0.0
    %611 = vmatprep.subr.mxu0 0.0
    %612 = vmatpush1.msra.mxu0 0.0
    %613 = vmatprep.subr.mxu0 0.0
    %614 = vmatpush1.msra.mxu0 0.0
    %615 = vmatprep.subr.mxu0 0.0
    %616 = vmatpush1.msra.mxu0 0.0
    %617 = vmatprep.subr.mxu0 0.0
    %618 = vmatpush1.msra.mxu0 0.0
    %619 = vmatprep.subr.mxu0 0.0
    %620 = vmatpush1.msra.mxu0 0.0
    %621 = vmatprep.subr.mxu0 0.0
    %622 = vmatpush1.msra.mxu0 0.0
    %623 = vmatprep.subr.mxu0 0.0
    %624 = vmatpush1.msra.mxu0 0.0
    %625 = vmatprep.subr.mxu0 0.0
    %626 = vmatpush1.msra.mxu0 0.0
    %627 = vmatprep.subr.mxu0 0.0
    %628 = vmatpush1.msra.mxu0 0.0
    %629 = vmatprep.subr.mxu0 0.0
    %630 = vmatpush1.msra.mxu0 0.0
    %631 = vmatprep.mubr.f32.mxu0 0.0
    %632 = vmatmul.mubr.f32.gmra.mrb[0].mxu0 %v339
    %v633 = vpop.f32.mrb[0].mxu0
    %v634 = vadd.f32 0.0, %v633
    %v635 = vpop.f32.mrb[0].mxu0
    %636 = vdwg.mxu0
    %v637 = vadd.f32 %v122, %v634
    %v638 = vmax.f32 %v637, 0.0
    %639 = vmatprep.subr.mxu0 0.0
    %640 = vmatpush1.msra.mxu0 %v566
    %641 = vmatprep.subr.mxu0 0.0
    %642 = vmatpush1.msra.mxu0 0.0
    %643 = vmatprep.subr.mxu0 0.0
    %644 = vmatpush1.msra.mxu0 0.0
    %645 = vmatprep.subr.mxu0 0.0
    %646 = vmatpush1.msra.mxu0 0.0
    %647 = vmatprep.subr.mxu0 0.0
    %648 = vmatpush1.msra.mxu0 0.0
    %649 = vmatprep.subr.mxu0 0.0
    %650 = vmatpush1.msra.mxu0 0.0
    %651 = vmatprep.subr.mxu0 0.0
    %652 = vmatpush1.msra.mxu0 0.0
    %653 = vmatprep.subr.mxu0 0.0
    %654 = vmatpush1.msra.mxu0 0.0
    %655 = vmatprep.subr.mxu0 0.0
    %656 = vmatpush1.msra.mxu0 0.0
    %657 = vmatprep.subr.mxu0 0.0
    %658 = vmatpush1.msra.mxu0 0.0
    %659 = vmatprep.subr.mxu0 0.0
    %660 = vmatpush1.msra.mxu0 0.0
    %661 = vmatprep.subr.mxu0 0.0
    %662 = vmatpush1.msra.mxu0 0.0
    %663 = vmatprep.subr.mxu0 0.0
    %664 = vmatpush1.msra.mxu0 0.0
    %665 = vmatprep.subr.mxu0 0.0
    %666 = vmatpush1.msra.mxu0 0.0
    %667 = vmatprep.subr.mxu0 0.0
    %668 = vmatpush1.msra.mxu0 0.0
    %669 = vmatprep.subr.mxu0 0.0
    %670 = vmatpush1.msra.mxu0 0.0
    %671 = vmatprep.subr.mxu0 0.0
    %672 = vmatpush1.msra.mxu0 0.0
    %673 = vmatprep.subr.mxu0 0.0
    %674 = vmatpush1.msra.mxu0 0.0
    %675 = vmatprep.subr.mxu0 0.0
    %676 = vmatpush1.msra.mxu0 0.0
    %677 = vmatprep.subr.mxu0 0.0
    %678 = vmatpush1.msra.mxu0 0.0
    %679 = vmatprep.subr.mxu0 0.0
    %680 = vmatpush1.msra.mxu0 0.0
    %681 = vmatprep.subr.mxu0 0.0
    %682 = vmatpush1.msra.mxu0 0.0
    %683 = vmatprep.subr.mxu0 0.0
    %684 = vmatpush1.msra.mxu0 0.0
    %685 = vmatprep.subr.mxu0 0.0
    %686 = vmatpush1.msra.mxu0 0.0
    %687 = vmatprep.subr.mxu0 0.0
    %688 = vmatpush1.msra.mxu0 0.0
    %689 = vmatprep.subr.mxu0 0.0
    %690 = vmatpush1.msra.mxu0 0.0
    %691 = vmatprep.subr.mxu0 0.0
    %692 = vmatpush1.msra.mxu0 0.0
    %693 = vmatprep.subr.mxu0 0.0
    %694 = vmatpush1.msra.mxu0 0.0
    %695 = vmatprep.subr.mxu0 0.0
    %696 = vmatpush1.msra.mxu0 0.0
    %697 = vmatprep.subr.mxu0 0.0
    %698 = vmatpush1.msra.mxu0 0.0
    %699 = vmatprep.subr.mxu0 0.0
    %700 = vmatpush1.msra.mxu0 0.0
    %701 = vmatprep.subr.mxu0 0.0
    %702 = vmatpush1.msra.mxu0 0.0
    %703 = vmatprep.mubr.f32.mxu0 0.0
    %704 = vmatmul.mubr.f32.gmra.mrb[0].mxu0 %v415
    %v705 = vpop.f32.mrb[0].mxu0
    %v706 = vadd.f32 0.0, %v705
    %v707 = vpop.f32.mrb[0].mxu0
    %708 = vdwg.mxu0
    %709 = vmatprep.subr.mxu0 0.0
    %710 = vmatpush1.msra.mxu0 %v638
    %711 = vmatprep.subr.mxu0 0.0
    %712 = vmatpush1.msra.mxu0 0.0
    %713 = vmatprep.subr.mxu0 0.0
    %714 = vmatpush1.msra.mxu0 0.0
    %715 = vmatprep.subr.mxu0 0.0
    %716 = vmatpush1.msra.mxu0 0.0
    %717 = vmatprep.subr.mxu0 0.0
    %718 = vmatpush1.msra.mxu0 0.0
    %719 = vmatprep.subr.mxu0 0.0
    %720 = vmatpush1.msra.mxu0 0.0
    %721 = vmatprep.subr.mxu0 0.0
    %722 = vmatpush1.msra.mxu0 0.0
    %723 = vmatprep.subr.mxu0 0.0
    %724 = vmatpush1.msra.mxu0 0.0
    %725 = vmatprep.subr.mxu0 0.0
    %726 = vmatpush1.msra.mxu0 0.0
    %727 = vmatprep.subr.mxu0 0.0
    %728 = vmatpush1.msra.mxu0 0.0
    %729 = vmatprep.subr.mxu0 0.0
    %730 = vmatpush1.msra.mxu0 0.0
    %731 = vmatprep.subr.mxu0 0.0
    %732 = vmatpush1.msra.mxu0 0.0
    %733 = vmatprep.subr.mxu0 0.0
    %734 = vmatpush1.msra.mxu0 0.0
    %735 = vmatprep.subr.mxu0 0.0
    %736 = vmatpush1.msra.mxu0 0.0
    %737 = vmatprep.subr.mxu0 0.0
    %738 = vmatpush1.msra.mxu0 0.0
    %739 = vmatprep.subr.mxu0 0.0
    %740 = vmatpush1.msra.mxu0 0.0
    %741 = vmatprep.subr.mxu0 0.0
    %742 = vmatpush1.msra.mxu0 0.0
    %743 = vmatprep.subr.mxu0 0.0
    %744 = vmatpush1.msra.mxu0 0.0
    %745 = vmatprep.subr.mxu0 0.0
    %746 = vmatpush1.msra.mxu0 0.0
    %747 = vmatprep.subr.mxu0 0.0
    %748 = vmatpush1.msra.mxu0 0.0
    %749 = vmatprep.subr.mxu0 0.0
    %750 = vmatpush1.msra.mxu0 0.0
    %751 = vmatprep.subr.mxu0 0.0
    %752 = vmatpush1.msra.mxu0 0.0
    %753 = vmatprep.subr.mxu0 0.0
    %754 = vmatpush1.msra.mxu0 0.0
    %755 = vmatprep.subr.mxu0 0.0
    %756 = vmatpush1.msra.mxu0 0.0
    %757 = vmatprep.subr.mxu0 0.0
    %758 = vmatpush1.msra.mxu0 0.0
    %759 = vmatprep.subr.mxu0 0.0
    %760 = vmatpush1.msra.mxu0 0.0
    %761 = vmatprep.subr.mxu0 0.0
    %762 = vmatpush1.msra.mxu0 0.0
    %763 = vmatprep.subr.mxu0 0.0
    %764 = vmatpush1.msra.mxu0 0.0
    %765 = vmatprep.subr.mxu0 0.0
    %766 = vmatpush1.msra.mxu0 0.0
    %767 = vmatprep.subr.mxu0 0.0
    %768 = vmatpush1.msra.mxu0 0.0
    %769 = vmatprep.subr.mxu0 0.0
    %770 = vmatpush1.msra.mxu0 0.0
    %771 = vmatprep.subr.mxu0 0.0
    %772 = vmatpush1.msra.mxu0 0.0
    %773 = vmatprep.mubr.f32.mxu0 0.0
    %774 = vmatmul.mubr.f32.gmra.mrb[0].mxu0 %v489
    %v775 = vpop.f32.mrb[0].mxu0
    %v776 = vadd.f32 %v706, %v775
    %v777 = vpop.f32.mrb[0].mxu0
    %778 = vdwg.mxu0
    %v779 = vadd.f32 %v776, %v563
    %v780 = vmax.f32 %v779, 0.0
    %781 = vmatprep.subr.mxu0 0.0
    %782 = vmatpush1.msra.mxu0 %v638
    %783 = vmatprep.subr.mxu0 0.0
    %784 = vmatpush1.msra.mxu0 0.0
    %785 = vmatprep.subr.mxu0 0.0
    %786 = vmatpush1.msra.mxu0 0.0
    %787 = vmatprep.subr.mxu0 0.0
    %788 = vmatpush1.msra.mxu0 0.0
    %789 = vmatprep.subr.mxu0 0.0
    %790 = vmatpush1.msra.mxu0 0.0
    %791 = vmatprep.subr.mxu0 0.0
    %792 = vmatpush1.msra.mxu0 0.0
    %793 = vmatprep.subr.mxu0 0.0
    %794 = vmatpush1.msra.mxu0 0.0
    %795 = vmatprep.subr.mxu0 0.0
    %796 = vmatpush1.msra.mxu0 0.0
    %797 = vmatprep.subr.mxu0 0.0
    %798 = vmatpush1.msra.mxu0 0.0
    %799 = vmatprep.subr.mxu0 0.0
    %800 = vmatpush1.msra.mxu0 0.0
    %801 = vmatprep.subr.mxu0 0.0
    %802 = vmatpush1.msra.mxu0 0.0
    %803 = vmatprep.subr.mxu0 0.0
    %804 = vmatpush1.msra.mxu0 0.0
    %805 = vmatprep.subr.mxu0 0.0
    %806 = vmatpush1.msra.mxu0 0.0
    %807 = vmatprep.subr.mxu0 0.0
    %808 = vmatpush1.msra.mxu0 0.0
    %809 = vmatprep.subr.mxu0 0.0
    %810 = vmatpush1.msra.mxu0 0.0
    %811 = vmatprep.subr.mxu0 0.0
    %812 = vmatpush1.msra.mxu0 0.0
    %813 = vmatprep.subr.mxu0 0.0
    %814 = vmatpush1.msra.mxu0 0.0
    %815 = vmatprep.subr.mxu0 0.0
    %816 = vmatpush1.msra.mxu0 0.0
    %817 = vmatprep.subr.mxu0 0.0
    %818 = vmatpush1.msra.mxu0 0.0
    %819 = vmatprep.subr.mxu0 0.0
    %820 = vmatpush1.msra.mxu0 0.0
    %821 = vmatprep.subr.mxu0 0.0
    %822 = vmatpush1.msra.mxu0 0.0
    %823 = vmatprep.subr.mxu0 0.0
    %824 = vmatpush1.msra.mxu0 0.0
    %825 = vmatprep.subr.mxu0 0.0
    %826 = vmatpush1.msra.mxu0 0.0
    %827 = vmatprep.subr.mxu0 0.0
    %828 = vmatpush1.msra.mxu0 0.0
    %829 = vmatprep.subr.mxu0 0.0
    %830 = vmatpush1.msra.mxu0 0.0
    %831 = vmatprep.subr.mxu0 0.0
    %832 = vmatpush1.msra.mxu0 0.0
    %833 = vmatprep.subr.mxu0 0.0
    %834 = vmatpush1.msra.mxu0 0.0
    %835 = vmatprep.subr.mxu0 0.0
    %836 = vmatpush1.msra.mxu0 0.0
    %837 = vmatprep.subr.mxu0 0.0
    %838 = vmatpush1.msra.mxu0 0.0
    %839 = vmatprep.subr.mxu0 0.0
    %840 = vmatpush1.msra.mxu0 0.0
    %841 = vmatprep.subr.mxu0 0.0
    %842 = vmatpush1.msra.mxu0 0.0
    %843 = vmatprep.subr.mxu0 0.0
    %844 = vmatpush1.msra.mxu0 0.0
    %845 = vmatprep.mubr.f32.mxu0 0.0
    %846 = vmatmul.mubr.f32.gmra.mrb[0].mxu0 %v339
    %v847 = vpop.f32.mrb[0].mxu0
    %v848 = vadd.f32 0.0, %v847
    %v849 = vpop.f32.mrb[0].mxu0
    %850 = vdwg.mxu0
    %v851 = vadd.f32 %v191, %v848
    %v852 = vmax.f32 %v851, 0.0
    %853 = vmatprep.subr.mxu0 0.0
    %854 = vmatpush1.msra.mxu0 %v780
    %855 = vmatprep.subr.mxu0 0.0
    %856 = vmatpush1.msra.mxu0 0.0
    %857 = vmatprep.subr.mxu0 0.0
    %858 = vmatpush1.msra.mxu0 0.0
    %859 = vmatprep.subr.mxu0 0.0
    %860 = vmatpush1.msra.mxu0 0.0
    %861 = vmatprep.subr.mxu0 0.0
    %862 = vmatpush1.msra.mxu0 0.0
    %863 = vmatprep.subr.mxu0 0.0
    %864 = vmatpush1.msra.mxu0 0.0
    %865 = vmatprep.subr.mxu0 0.0
    %866 = vmatpush1.msra.mxu0 0.0
    %867 = vmatprep.subr.mxu0 0.0
    %868 = vmatpush1.msra.mxu0 0.0
    %869 = vmatprep.subr.mxu0 0.0
    %870 = vmatpush1.msra.mxu0 0.0
    %871 = vmatprep.subr.mxu0 0.0
    %872 = vmatpush1.msra.mxu0 0.0
    %873 = vmatprep.subr.mxu0 0.0
    %874 = vmatpush1.msra.mxu0 0.0
    %875 = vmatprep.subr.mxu0 0.0
    %876 = vmatpush1.msra.mxu0 0.0
    %877 = vmatprep.subr.mxu0 0.0
    %878 = vmatpush1.msra.mxu0 0.0
    %879 = vmatprep.subr.mxu0 0.0
    %880 = vmatpush1.msra.mxu0 0.0
    %881 = vmatprep.subr.mxu0 0.0
    %882 = vmatpush1.msra.mxu0 0.0
    %883 = vmatprep.subr.mxu0 0.0
    %884 = vmatpush1.msra.mxu0 0.0
    %885 = vmatprep.subr.mxu0 0.0
    %886 = vmatpush1.msra.mxu0 0.0
    %887 = vmatprep.subr.mxu0 0.0
    %888 = vmatpush1.msra.mxu0 0.0
    %889 = vmatprep.subr.mxu0 0.0
    %890 = vmatpush1.msra.mxu0 0.0
    %891 = vmatprep.subr.mxu0 0.0
    %892 = vmatpush1.msra.mxu0 0.0
    %893 = vmatprep.subr.mxu0 0.0
    %894 = vmatpush1.msra.mxu0 0.0
    %895 = vmatprep.subr.mxu0 0.0
    %896 = vmatpush1.msra.mxu0 0.0
    %897 = vmatprep.subr.mxu0 0.0
    %898 = vmatpush1.msra.mxu0 0.0
    %899 = vmatprep.subr.mxu0 0.0
    %900 = vmatpush1.msra.mxu0 0.0
    %901 = vmatprep.subr.mxu0 0.0
    %902 = vmatpush1.msra.mxu0 0.0
    %903 = vmatprep.subr.mxu0 0.0
    %904 = vmatpush1.msra.mxu0 0.0
    %905 = vmatprep.subr.mxu0 0.0
    %906 = vmatpush1.msra.mxu0 0.0
    %907 = vmatprep.subr.mxu0 0.0
    %908 = vmatpush1.msra.mxu0 0.0
    %909 = vmatprep.subr.mxu0 0.0
    %910 = vmatpush1.msra.mxu0 0.0
    %911 = vmatprep.subr.mxu0 0.0
    %912 = vmatpush1.msra.mxu0 0.0
    %913 = vmatprep.subr.mxu0 0.0
    %914 = vmatpush1.msra.mxu0 0.0
    %915 = vmatprep.subr.mxu0 0.0
    %916 = vmatpush1.msra.mxu0 0.0
    %917 = vmatprep.mubr.f32.mxu0 0.0
    %918 = vmatmul.mubr.f32.gmra.mrb[0].mxu0 %v415
    %v919 = vpop.f32.mrb[0].mxu0
    %v920 = vadd.f32 0.0, %v919
    %v921 = vpop.f32.mrb[0].mxu0
    %922 = vdwg.mxu0
    %923 = vmatprep.subr.mxu0 0.0
    %924 = vmatpush1.msra.mxu0 %v852
    %925 = vmatprep.subr.mxu0 0.0
    %926 = vmatpush1.msra.mxu0 0.0
    %927 = vmatprep.subr.mxu0 0.0
    %928 = vmatpush1.msra.mxu0 0.0
    %929 = vmatprep.subr.mxu0 0.0
    %930 = vmatpush1.msra.mxu0 0.0
    %931 = vmatprep.subr.mxu0 0.0
    %932 = vmatpush1.msra.mxu0 0.0
    %933 = vmatprep.subr.mxu0 0.0
    %934 = vmatpush1.msra.mxu0 0.0
    %935 = vmatprep.subr.mxu0 0.0
    %936 = vmatpush1.msra.mxu0 0.0
    %937 = vmatprep.subr.mxu0 0.0
    %938 = vmatpush1.msra.mxu0 0.0
    %939 = vmatprep.subr.mxu0 0.0
    %940 = vmatpush1.msra.mxu0 0.0
    %941 = vmatprep.subr.mxu0 0.0
    %942 = vmatpush1.msra.mxu0 0.0
    %943 = vmatprep.subr.mxu0 0.0
    %944 = vmatpush1.msra.mxu0 0.0
    %945 = vmatprep.subr.mxu0 0.0
    %946 = vmatpush1.msra.mxu0 0.0
    %947 = vmatprep.subr.mxu0 0.0
    %948 = vmatpush1.msra.mxu0 0.0
    %949 = vmatprep.subr.mxu0 0.0
    %950 = vmatpush1.msra.mxu0 0.0
    %951 = vmatprep.subr.mxu0 0.0
    %952 = vmatpush1.msra.mxu0 0.0
    %953 = vmatprep.subr.mxu0 0.0
    %954 = vmatpush1.msra.mxu0 0.0
    %955 = vmatprep.subr.mxu0 0.0
    %956 = vmatpush1.msra.mxu0 0.0
    %957 = vmatprep.subr.mxu0 0.0
    %958 = vmatpush1.msra.mxu0 0.0
    %959 = vmatprep.subr.mxu0 0.0
    %960 = vmatpush1.msra.mxu0 0.0
    %961 = vmatprep.subr.mxu0 0.0
    %962 = vmatpush1.msra.mxu0 0.0
    %963 = vmatprep.subr.mxu0 0.0
    %964 = vmatpush1.msra.mxu0 0.0
    %965 = vmatprep.subr.mxu0 0.0
    %966 = vmatpush1.msra.mxu0 0.0
    %967 = vmatprep.subr.mxu0 0.0
    %968 = vmatpush1.msra.mxu0 0.0
    %969 = vmatprep.subr.mxu0 0.0
    %970 = vmatpush1.msra.mxu0 0.0
    %971 = vmatprep.subr.mxu0 0.0
    %972 = vmatpush1.msra.mxu0 0.0
    %973 = vmatprep.subr.mxu0 0.0
    %974 = vmatpush1.msra.mxu0 0.0
    %975 = vmatprep.subr.mxu0 0.0
    %976 = vmatpush1.msra.mxu0 0.0
    %977 = vmatprep.subr.mxu0 0.0
    %978 = vmatpush1.msra.mxu0 0.0
    %979 = vmatprep.subr.mxu0 0.0
    %980 = vmatpush1.msra.mxu0 0.0
    %981 = vmatprep.subr.mxu0 0.0
    %982 = vmatpush1.msra.mxu0 0.0
    %983 = vmatprep.subr.mxu0 0.0
    %984 = vmatpush1.msra.mxu0 0.0
    %985 = vmatprep.subr.mxu0 0.0
    %986 = vmatpush1.msra.mxu0 0.0
    %987 = vmatprep.mubr.f32.mxu0 0.0
    %988 = vmatmul.mubr.f32.gmra.mrb[0].mxu0 %v489
    %v989 = vpop.f32.mrb[0].mxu0
    %v990 = vadd.f32 %v920, %v989
    %v991 = vpop.f32.mrb[0].mxu0
    %992 = vdwg.mxu0
    %v993 = vadd.f32 %v990, %v563
    %v994 = vmax.f32 %v993, 0.0
    %995 = vmatprep.subr.mxu0 0.0
    %996 = vmatpush1.msra.mxu0 %v852
    %997 = vmatprep.subr.mxu0 0.0
    %998 = vmatpush1.msra.mxu0 0.0
    %999 = vmatprep.subr.mxu0 0.0
    %1000 = vmatpush1.msra.mxu0 0.0
    %1001 = vmatprep.subr.mxu0 0.0
    %1002 = vmatpush1.msra.mxu0 0.0
    %1003 = vmatprep.subr.mxu0 0.0
    %1004 = vmatpush1.msra.mxu0 0.0
    %1005 = vmatprep.subr.mxu0 0.0
    %1006 = vmatpush1.msra.mxu0 0.0
    %1007 = vmatprep.subr.mxu0 0.0
    %1008 = vmatpush1.msra.mxu0 0.0
    %1009 = vmatprep.subr.mxu0 0.0
    %1010 = vmatpush1.msra.mxu0 0.0
    %1011 = vmatprep.subr.mxu0 0.0
    %1012 = vmatpush1.msra.mxu0 0.0
    %1013 = vmatprep.subr.mxu0 0.0
    %1014 = vmatpush1.msra.mxu0 0.0
    %1015 = vmatprep.subr.mxu0 0.0
    %1016 = vmatpush1.msra.mxu0 0.0
    %1017 = vmatprep.subr.mxu0 0.0
    %1018 = vmatpush1.msra.mxu0 0.0
    %1019 = vmatprep.subr.mxu0 0.0
    %1020 = vmatpush1.msra.mxu0 0.0
    %1021 = vmatprep.subr.mxu0 0.0
    %1022 = vmatpush1.msra.mxu0 0.0
    %1023 = vmatprep.subr.mxu0 0.0
    %1024 = vmatpush1.msra.mxu0 0.0
    %1025 = vmatprep.subr.mxu0 0.0
    %1026 = vmatpush1.msra.mxu0 0.0
    %1027 = vmatprep.subr.mxu0 0.0
    %1028 = vmatpush1.msra.mxu0 0.0
    %1029 = vmatprep.subr.mxu0 0.0
    %1030 = vmatpush1.msra.mxu0 0.0
    %1031 = vmatprep.subr.mxu0 0.0
    %1032 = vmatpush1.msra.mxu0 0.0
    %1033 = vmatprep.subr.mxu0 0.0
    %1034 = vmatpush1.msra.mxu0 0.0
    %1035 = vmatprep.subr.mxu0 0.0
    %1036 = vmatpush1.msra.mxu0 0.0
    %1037 = vmatprep.subr.mxu0 0.0
    %1038 = vmatpush1.msra.mxu0 0.0
    %1039 = vmatprep.subr.mxu0 0.0
    %1040 = vmatpush1.msra.mxu0 0.0
    %1041 = vmatprep.subr.mxu0 0.0
    %1042 = vmatpush1.msra.mxu0 0.0
    %1043 = vmatprep.subr.mxu0 0.0
    %1044 = vmatpush1.msra.mxu0 0.0
    %1045 = vmatprep.subr.mxu0 0.0
    %1046 = vmatpush1.msra.mxu0 0.0
    %1047 = vmatprep.subr.mxu0 0.0
    %1048 = vmatpush1.msra.mxu0 0.0
    %1049 = vmatprep.subr.mxu0 0.0
    %1050 = vmatpush1.msra.mxu0 0.0
    %1051 = vmatprep.subr.mxu0 0.0
    %1052 = vmatpush1.msra.mxu0 0.0
    %1053 = vmatprep.subr.mxu0 0.0
    %1054 = vmatpush1.msra.mxu0 0.0
    %1055 = vmatprep.subr.mxu0 0.0
    %1056 = vmatpush1.msra.mxu0 0.0
    %1057 = vmatprep.subr.mxu0 0.0
    %1058 = vmatpush1.msra.mxu0 0.0
    %1059 = vmatprep.mubr.f32.mxu0 0.0
    %1060 = vmatmul.mubr.f32.gmra.mrb[0].mxu0 %v339
    %v1061 = vpop.f32.mrb[0].mxu0
    %v1062 = vadd.f32 0.0, %v1061
    %v1063 = vpop.f32.mrb[0].mxu0
    %1064 = vdwg.mxu0
    %v1065 = vadd.f32 %v193, %v1062
    %v1066 = vmax.f32 %v1065, 0.0
    %1067 = vmatprep.subr.mxu0 0.0
    %1068 = vmatpush1.msra.mxu0 %v994
    %1069 = vmatprep.subr.mxu0 0.0
    %1070 = vmatpush1.msra.mxu0 0.0
    %1071 = vmatprep.subr.mxu0 0.0
    %1072 = vmatpush1.msra.mxu0 0.0
    %1073 = vmatprep.subr.mxu0 0.0
    %1074 = vmatpush1.msra.mxu0 0.0
    %1075 = vmatprep.subr.mxu0 0.0
    %1076 = vmatpush1.msra.mxu0 0.0
    %1077 = vmatprep.subr.mxu0 0.0
    %1078 = vmatpush1.msra.mxu0 0.0
    %1079 = vmatprep.subr.mxu0 0.0
    %1080 = vmatpush1.msra.mxu0 0.0
    %1081 = vmatprep.subr.mxu0 0.0
    %1082 = vmatpush1.msra.mxu0 0.0
    %1083 = vmatprep.subr.mxu0 0.0
    %1084 = vmatpush1.msra.mxu0 0.0
    %1085 = vmatprep.subr.mxu0 0.0
    %1086 = vmatpush1.msra.mxu0 0.0
    %1087 = vmatprep.subr.mxu0 0.0
    %1088 = vmatpush1.msra.mxu0 0.0
    %1089 = vmatprep.subr.mxu0 0.0
    %1090 = vmatpush1.msra.mxu0 0.0
    %1091 = vmatprep.subr.mxu0 0.0
    %1092 = vmatpush1.msra.mxu0 0.0
    %1093 = vmatprep.subr.mxu0 0.0
    %1094 = vmatpush1.msra.mxu0 0.0
    %1095 = vmatprep.subr.mxu0 0.0
    %1096 = vmatpush1.msra.mxu0 0.0
    %1097 = vmatprep.subr.mxu0 0.0
    %1098 = vmatpush1.msra.mxu0 0.0
    %1099 = vmatprep.subr.mxu0 0.0
    %1100 = vmatpush1.msra.mxu0 0.0
    %1101 = vmatprep.subr.mxu0 0.0
    %1102 = vmatpush1.msra.mxu0 0.0
    %1103 = vmatprep.subr.mxu0 0.0
    %1104 = vmatpush1.msra.mxu0 0.0
    %1105 = vmatprep.subr.mxu0 0.0
    %1106 = vmatpush1.msra.mxu0 0.0
    %1107 = vmatprep.subr.mxu0 0.0
    %1108 = vmatpush1.msra.mxu0 0.0
    %1109 = vmatprep.subr.mxu0 0.0
    %1110 = vmatpush1.msra.mxu0 0.0
    %1111 = vmatprep.subr.mxu0 0.0
    %1112 = vmatpush1.msra.mxu0 0.0
    %1113 = vmatprep.subr.mxu0 0.0
    %1114 = vmatpush1.msra.mxu0 0.0
    %1115 = vmatprep.subr.mxu0 0.0
    %1116 = vmatpush1.msra.mxu0 0.0
    %1117 = vmatprep.subr.mxu0 0.0
    %1118 = vmatpush1.msra.mxu0 0.0
    %1119 = vmatprep.subr.mxu0 0.0
    %1120 = vmatpush1.msra.mxu0 0.0
    %1121 = vmatprep.subr.mxu0 0.0
    %1122 = vmatpush1.msra.mxu0 0.0
    %1123 = vmatprep.subr.mxu0 0.0
    %1124 = vmatpush1.msra.mxu0 0.0
    %1125 = vmatprep.subr.mxu0 0.0
    %1126 = vmatpush1.msra.mxu0 0.0
    %1127 = vmatprep.subr.mxu0 0.0
    %1128 = vmatpush1.msra.mxu0 0.0
    %1129 = vmatprep.subr.mxu0 0.0
    %1130 = vmatpush1.msra.mxu0 0.0
    %1131 = vmatprep.mubr.f32.mxu0 0.0
    %1132 = vmatmul.mubr.f32.gmra.mrb[0].mxu0 %v415
    %v1133 = vpop.f32.mrb[0].mxu0
    %v1134 = vadd.f32 0.0, %v1133
    %v1135 = vpop.f32.mrb[0].mxu0
    %1136 = vdwg.mxu0
    %1137 = vmatprep.subr.mxu0 0.0
    %1138 = vmatpush1.msra.mxu0 %v1066
    %1139 = vmatprep.subr.mxu0 0.0
    %1140 = vmatpush1.msra.mxu0 0.0
    %1141 = vmatprep.subr.mxu0 0.0
    %1142 = vmatpush1.msra.mxu0 0.0
    %1143 = vmatprep.subr.mxu0 0.0
    %1144 = vmatpush1.msra.mxu0 0.0
    %1145 = vmatprep.subr.mxu0 0.0
    %1146 = vmatpush1.msra.mxu0 0.0
    %1147 = vmatprep.subr.mxu0 0.0
    %1148 = vmatpush1.msra.mxu0 0.0
    %1149 = vmatprep.subr.mxu0 0.0
    %1150 = vmatpush1.msra.mxu0 0.0
    %1151 = vmatprep.subr.mxu0 0.0
    %1152 = vmatpush1.msra.mxu0 0.0
    %1153 = vmatprep.subr.mxu0 0.0
    %1154 = vmatpush1.msra.mxu0 0.0
    %1155 = vmatprep.subr.mxu0 0.0
    %1156 = vmatpush1.msra.mxu0 0.0
    %1157 = vmatprep.subr.mxu0 0.0
    %1158 = vmatpush1.msra.mxu0 0.0
    %1159 = vmatprep.subr.mxu0 0.0
    %1160 = vmatpush1.msra.mxu0 0.0
    %1161 = vmatprep.subr.mxu0 0.0
    %1162 = vmatpush1.msra.mxu0 0.0
    %1163 = vmatprep.subr.mxu0 0.0
    %1164 = vmatpush1.msra.mxu0 0.0
    %1165 = vmatprep.subr.mxu0 0.0
    %1166 = vmatpush1.msra.mxu0 0.0
    %1167 = vmatprep.subr.mxu0 0.0
    %1168 = vmatpush1.msra.mxu0 0.0
    %1169 = vmatprep.subr.mxu0 0.0
    %1170 = vmatpush1.msra.mxu0 0.0
    %1171 = vmatprep.subr.mxu0 0.0
    %1172 = vmatpush1.msra.mxu0 0.0
    %1173 = vmatprep.subr.mxu0 0.0
    %1174 = vmatpush1.msra.mxu0 0.0
    %1175 = vmatprep.subr.mxu0 0.0
    %1176 = vmatpush1.msra.mxu0 0.0
    %1177 = vmatprep.subr.mxu0 0.0
    %1178 = vmatpush1.msra.mxu0 0.0
    %1179 = vmatprep.subr.mxu0 0.0
    %1180 = vmatpush1.msra.mxu0 0.0
    %1181 = vmatprep.subr.mxu0 0.0
    %1182 = vmatpush1.msra.mxu0 0.0
    %1183 = vmatprep.subr.mxu0 0.0
    %1184 = vmatpush1.msra.mxu0 0.0
    %1185 = vmatprep.subr.mxu0 0.0
    %1186 = vmatpush1.msra.mxu0 0.0
    %1187 = vmatprep.subr.mxu0 0.0
    %1188 = vmatpush1.msra.mxu0 0.0
    %1189 = vmatprep.subr.mxu0 0.0
    %1190 = vmatpush1.msra.mxu0 0.0
    %1191 = vmatprep.subr.mxu0 0.0
    %1192 = vmatpush1.msra.mxu0 0.0
    %1193 = vmatprep.subr.mxu0 0.0
    %1194 = vmatpush1.msra.mxu0 0.0
    %1195 = vmatprep.subr.mxu0 0.0
    %1196 = vmatpush1.msra.mxu0 0.0
    %1197 = vmatprep.subr.mxu0 0.0
    %1198 = vmatpush1.msra.mxu0 0.0
    %1199 = vmatprep.subr.mxu0 0.0
    %1200 = vmatpush1.msra.mxu0 0.0
    %1201 = vmatprep.mubr.f32.mxu0 0.0
    %1202 = vmatmul.mubr.f32.gmra.mrb[0].mxu0 %v489
    %v1203 = vpop.f32.mrb[0].mxu0
    %v1204 = vadd.f32 %v1134, %v1203
    %v1205 = vpop.f32.mrb[0].mxu0
    %1206 = vdwg.mxu0
    %v1207 = vadd.f32 %v1204, %v563
    %v1208 = vmax.f32 %v1207, 0.0
    %1209 = vmatprep.subr.mxu0 0.0
    %1210 = vmatpush1.msra.mxu0 %v1066
    %1211 = vmatprep.subr.mxu0 0.0
    %1212 = vmatpush1.msra.mxu0 0.0
    %1213 = vmatprep.subr.mxu0 0.0
    %1214 = vmatpush1.msra.mxu0 0.0
    %1215 = vmatprep.subr.mxu0 0.0
    %1216 = vmatpush1.msra.mxu0 0.0
    %1217 = vmatprep.subr.mxu0 0.0
    %1218 = vmatpush1.msra.mxu0 0.0
    %1219 = vmatprep.subr.mxu0 0.0
    %1220 = vmatpush1.msra.mxu0 0.0
    %1221 = vmatprep.subr.mxu0 0.0
    %1222 = vmatpush1.msra.mxu0 0.0
    %1223 = vmatprep.subr.mxu0 0.0
    %1224 = vmatpush1.msra.mxu0 0.0
    %1225 = vmatprep.subr.mxu0 0.0
    %1226 = vmatpush1.msra.mxu0 0.0
    %1227 = vmatprep.subr.mxu0 0.0
    %1228 = vmatpush1.msra.mxu0 0.0
    %1229 = vmatprep.subr.mxu0 0.0
    %1230 = vmatpush1.msra.mxu0 0.0
    %1231 = vmatprep.subr.mxu0 0.0
    %1232 = vmatpush1.msra.mxu0 0.0
    %1233 = vmatprep.subr.mxu0 0.0
    %1234 = vmatpush1.msra.mxu0 0.0
    %1235 = vmatprep.subr.mxu0 0.0
    %1236 = vmatpush1.msra.mxu0 0.0
    %1237 = vmatprep.subr.mxu0 0.0
    %1238 = vmatpush1.msra.mxu0 0.0
    %1239 = vmatprep.subr.mxu0 0.0
    %1240 = vmatpush1.msra.mxu0 0.0
    %1241 = vmatprep.subr.mxu0 0.0
    %1242 = vmatpush1.msra.mxu0 0.0
    %1243 = vmatprep.subr.mxu0 0.0
    %1244 = vmatpush1.msra.mxu0 0.0
    %1245 = vmatprep.subr.mxu0 0.0
    %1246 = vmatpush1.msra.mxu0 0.0
    %1247 = vmatprep.subr.mxu0 0.0
    %1248 = vmatpush1.msra.mxu0 0.0
    %1249 = vmatprep.subr.mxu0 0.0
    %1250 = vmatpush1.msra.mxu0 0.0
    %1251 = vmatprep.subr.mxu0 0.0
    %1252 = vmatpush1.msra.mxu0 0.0
    %1253 = vmatprep.subr.mxu0 0.0
    %1254 = vmatpush1.msra.mxu0 0.0
    %1255 = vmatprep.subr.mxu0 0.0
    %1256 = vmatpush1.msra.mxu0 0.0
    %1257 = vmatprep.subr.mxu0 0.0
    %1258 = vmatpush1.msra.mxu0 0.0
    %1259 = vmatprep.subr.mxu0 0.0
    %1260 = vmatpush1.msra.mxu0 0.0
    %1261 = vmatprep.subr.mxu0 0.0
    %1262 = vmatpush1.msra.mxu0 0.0
    %1263 = vmatprep.subr.mxu0 0.0
    %1264 = vmatpush1.msra.mxu0 0.0
    %1265 = vmatprep.subr.mxu0 0.0
    %1266 = vmatpush1.msra.mxu0 0.0
    %1267 = vmatprep.subr.mxu0 0.0
    %1268 = vmatpush1.msra.mxu0 0.0
    %1269 = vmatprep.subr.mxu0 0.0
    %1270 = vmatpush1.msra.mxu0 0.0
    %1271 = vmatprep.subr.mxu0 0.0
    %1272 = vmatpush1.msra.mxu0 0.0
    %1273 = vmatprep.mubr.f32.mxu0 0.0
    %1274 = vmatmul.mubr.f32.gmra.mrb[0].mxu0 %v339
    %v1275 = vpop.f32.mrb[0].mxu0
    %v1276 = vadd.f32 0.0, %v1275
    %v1277 = vpop.f32.mrb[0].mxu0
    %1278 = vdwg.mxu0
    %v1279 = vadd.f32 %v262, %v1276
    %v1280 = vmax.f32 %v1279, 0.0
    %1281 = vmatprep.subr.mxu0 0.0
    %1282 = vmatpush1.msra.mxu0 %v1208
    %1283 = vmatprep.subr.mxu0 0.0
    %1284 = vmatpush1.msra.mxu0 0.0
    %1285 = vmatprep.subr.mxu0 0.0
    %1286 = vmatpush1.msra.mxu0 0.0
    %1287 = vmatprep.subr.mxu0 0.0
    %1288 = vmatpush1.msra.mxu0 0.0
    %1289 = vmatprep.subr.mxu0 0.0
    %1290 = vmatpush1.msra.mxu0 0.0
    %1291 = vmatprep.subr.mxu0 0.0
    %1292 = vmatpush1.msra.mxu0 0.0
    %1293 = vmatprep.subr.mxu0 0.0
    %1294 = vmatpush1.msra.mxu0 0.0
    %1295 = vmatprep.subr.mxu0 0.0
    %1296 = vmatpush1.msra.mxu0 0.0
    %1297 = vmatprep.subr.mxu0 0.0
    %1298 = vmatpush1.msra.mxu0 0.0
    %1299 = vmatprep.subr.mxu0 0.0
    %1300 = vmatpush1.msra.mxu0 0.0
    %1301 = vmatprep.subr.mxu0 0.0
    %1302 = vmatpush1.msra.mxu0 0.0
    %1303 = vmatprep.subr.mxu0 0.0
    %1304 = vmatpush1.msra.mxu0 0.0
    %1305 = vmatprep.subr.mxu0 0.0
    %1306 = vmatpush1.msra.mxu0 0.0
    %1307 = vmatprep.subr.mxu0 0.0
    %1308 = vmatpush1.msra.mxu0 0.0
    %1309 = vmatprep.subr.mxu0 0.0
    %1310 = vmatpush1.msra.mxu0 0.0
    %1311 = vmatprep.subr.mxu0 0.0
    %1312 = vmatpush1.msra.mxu0 0.0
    %1313 = vmatprep.subr.mxu0 0.0
    %1314 = vmatpush1.msra.mxu0 0.0
    %1315 = vmatprep.subr.mxu0 0.0
    %1316 = vmatpush1.msra.mxu0 0.0
    %1317 = vmatprep.subr.mxu0 0.0
    %1318 = vmatpush1.msra.mxu0 0.0
    %1319 = vmatprep.subr.mxu0 0.0
    %1320 = vmatpush1.msra.mxu0 0.0
    %1321 = vmatprep.subr.mxu0 0.0
    %1322 = vmatpush1.msra.mxu0 0.0
    %1323 = vmatprep.subr.mxu0 0.0
    %1324 = vmatpush1.msra.mxu0 0.0
    %1325 = vmatprep.subr.mxu0 0.0
    %1326 = vmatpush1.msra.mxu0 0.0
    %1327 = vmatprep.subr.mxu0 0.0
    %1328 = vmatpush1.msra.mxu0 0.0
    %1329 = vmatprep.subr.mxu0 0.0
    %1330 = vmatpush1.msra.mxu0 0.0
    %1331 = vmatprep.subr.mxu0 0.0
    %1332 = vmatpush1.msra.mxu0 0.0
    %1333 = vmatprep.subr.mxu0 0.0
    %1334 = vmatpush1.msra.mxu0 0.0
    %1335 = vmatprep.subr.mxu0 0.0
    %1336 = vmatpush1.msra.mxu0 0.0
    %1337 = vmatprep.subr.mxu0 0.0
    %1338 = vmatpush1.msra.mxu0 0.0
    %1339 = vmatprep.subr.mxu0 0.0
    %1340 = vmatpush1.msra.mxu0 0.0
    %1341 = vmatprep.subr.mxu0 0.0
    %1342 = vmatpush1.msra.mxu0 0.0
    %1343 = vmatprep.subr.mxu0 0.0
    %1344 = vmatpush1.msra.mxu0 0.0
    %1345 = vmatprep.mubr.f32.mxu0 0.0
    %1346 = vmatmul.mubr.f32.gmra.mrb[0].mxu0 %v415
    %v1347 = vpop.f32.mrb[0].mxu0
    %v1348 = vadd.f32 0.0, %v1347
    %v1349 = vpop.f32.mrb[0].mxu0
    %1350 = vdwg.mxu0
    %1351 = vmatprep.subr.mxu0 0.0
    %1352 = vmatpush1.msra.mxu0 %v1280
    %1353 = vmatprep.subr.mxu0 0.0
    %1354 = vmatpush1.msra.mxu0 0.0
    %1355 = vmatprep.subr.mxu0 0.0
    %1356 = vmatpush1.msra.mxu0 0.0
    %1357 = vmatprep.subr.mxu0 0.0
    %1358 = vmatpush1.msra.mxu0 0.0
    %1359 = vmatprep.subr.mxu0 0.0
    %1360 = vmatpush1.msra.mxu0 0.0
    %1361 = vmatprep.subr.mxu0 0.0
    %1362 = vmatpush1.msra.mxu0 0.0
    %1363 = vmatprep.subr.mxu0 0.0
    %1364 = vmatpush1.msra.mxu0 0.0
    %1365 = vmatprep.subr.mxu0 0.0
    %1366 = vmatpush1.msra.mxu0 0.0
    %1367 = vmatprep.subr.mxu0 0.0
    %1368 = vmatpush1.msra.mxu0 0.0
    %1369 = vmatprep.subr.mxu0 0.0
    %1370 = vmatpush1.msra.mxu0 0.0
    %1371 = vmatprep.subr.mxu0 0.0
    %1372 = vmatpush1.msra.mxu0 0.0
    %1373 = vmatprep.subr.mxu0 0.0
    %1374 = vmatpush1.msra.mxu0 0.0
    %1375 = vmatprep.subr.mxu0 0.0
    %1376 = vmatpush1.msra.mxu0 0.0
    %1377 = vmatprep.subr.mxu0 0.0
    %1378 = vmatpush1.msra.mxu0 0.0
    %1379 = vmatprep.subr.mxu0 0.0
    %1380 = vmatpush1.msra.mxu0 0.0
    %1381 = vmatprep.subr.mxu0 0.0
    %1382 = vmatpush1.msra.mxu0 0.0
    %1383 = vmatprep.subr.mxu0 0.0
    %1384 = vmatpush1.msra.mxu0 0.0
    %1385 = vmatprep.subr.mxu0 0.0
    %1386 = vmatpush1.msra.mxu0 0.0
    %1387 = vmatprep.subr.mxu0 0.0
    %1388 = vmatpush1.msra.mxu0 0.0
    %1389 = vmatprep.subr.mxu0 0.0
    %1390 = vmatpush1.msra.mxu0 0.0
    %1391 = vmatprep.subr.mxu0 0.0
    %1392 = vmatpush1.msra.mxu0 0.0
    %1393 = vmatprep.subr.mxu0 0.0
    %1394 = vmatpush1.msra.mxu0 0.0
    %1395 = vmatprep.subr.mxu0 0.0
    %1396 = vmatpush1.msra.mxu0 0.0
    %1397 = vmatprep.subr.mxu0 0.0
    %1398 = vmatpush1.msra.mxu0 0.0
    %1399 = vmatprep.subr.mxu0 0.0
    %1400 = vmatpush1.msra.mxu0 0.0
    %1401 = vmatprep.subr.mxu0 0.0
    %1402 = vmatpush1.msra.mxu0 0.0
    %1403 = vmatprep.subr.mxu0 0.0
    %1404 = vmatpush1.msra.mxu0 0.0
    %1405 = vmatprep.subr.mxu0 0.0
    %1406 = vmatpush1.msra.mxu0 0.0
    %1407 = vmatprep.subr.mxu0 0.0
    %1408 = vmatpush1.msra.mxu0 0.0
    %1409 = vmatprep.subr.mxu0 0.0
    %1410 = vmatpush1.msra.mxu0 0.0
    %1411 = vmatprep.subr.mxu0 0.0
    %1412 = vmatpush1.msra.mxu0 0.0
    %1413 = vmatprep.subr.mxu0 0.0
    %1414 = vmatpush1.msra.mxu0 0.0
    %1415 = vmatprep.mubr.f32.mxu0 0.0
    %1416 = vmatmul.mubr.f32.gmra.mrb[0].mxu0 %v489
    %v1417 = vpop.f32.mrb[0].mxu0
    %v1418 = vadd.f32 %v1348, %v1417
    %v1419 = vpop.f32.mrb[0].mxu0
    %1420 = vdwg.mxu0
    %v1421 = vadd.f32 %v1418, %v563
    %v1422 = vmax.f32 %v1421, 0.0
    %1423 = vmatprep.subr.mxu0 0.0
    %1424 = vmatpush1.msra.mxu0 %v1280
    %1425 = vmatprep.subr.mxu0 0.0
    %1426 = vmatpush1.msra.mxu0 0.0
    %1427 = vmatprep.subr.mxu0 0.0
    %1428 = vmatpush1.msra.mxu0 0.0
    %1429 = vmatprep.subr.mxu0 0.0
    %1430 = vmatpush1.msra.mxu0 0.0
    %1431 = vmatprep.subr.mxu0 0.0
    %1432 = vmatpush1.msra.mxu0 0.0
    %1433 = vmatprep.subr.mxu0 0.0
    %1434 = vmatpush1.msra.mxu0 0.0
    %1435 = vmatprep.subr.mxu0 0.0
    %1436 = vmatpush1.msra.mxu0 0.0
    %1437 = vmatprep.subr.mxu0 0.0
    %1438 = vmatpush1.msra.mxu0 0.0
    %1439 = vmatprep.subr.mxu0 0.0
    %1440 = vmatpush1.msra.mxu0 0.0
    %1441 = vmatprep.subr.mxu0 0.0
    %1442 = vmatpush1.msra.mxu0 0.0
    %1443 = vmatprep.subr.mxu0 0.0
    %1444 = vmatpush1.msra.mxu0 0.0
    %1445 = vmatprep.subr.mxu0 0.0
    %1446 = vmatpush1.msra.mxu0 0.0
    %1447 = vmatprep.subr.mxu0 0.0
    %1448 = vmatpush1.msra.mxu0 0.0
    %1449 = vmatprep.subr.mxu0 0.0
    %1450 = vmatpush1.msra.mxu0 0.0
    %1451 = vmatprep.subr.mxu0 0.0
    %1452 = vmatpush1.msra.mxu0 0.0
    %1453 = vmatprep.subr.mxu0 0.0
    %1454 = vmatpush1.msra.mxu0 0.0
    %1455 = vmatprep.subr.mxu0 0.0
    %1456 = vmatpush1.msra.mxu0 0.0
    %1457 = vmatprep.subr.mxu0 0.0
    %1458 = vmatpush1.msra.mxu0 0.0
    %1459 = vmatprep.subr.mxu0 0.0
    %1460 = vmatpush1.msra.mxu0 0.0
    %1461 = vmatprep.subr.mxu0 0.0
    %1462 = vmatpush1.msra.mxu0 0.0
    %1463 = vmatprep.subr.mxu0 0.0
    %1464 = vmatpush1.msra.mxu0 0.0
    %1465 = vmatprep.subr.mxu0 0.0
    %1466 = vmatpush1.msra.mxu0 0.0
    %1467 = vmatprep.subr.mxu0 0.0
    %1468 = vmatpush1.msra.mxu0 0.0
    %1469 = vmatprep.subr.mxu0 0.0
    %1470 = vmatpush1.msra.mxu0 0.0
    %1471 = vmatprep.subr.mxu0 0.0
    %1472 = vmatpush1.msra.mxu0 0.0
    %1473 = vmatprep.subr.mxu0 0.0
    %1474 = vmatpush1.msra.mxu0 0.0
    %1475 = vmatprep.subr.mxu0 0.0
    %1476 = vmatpush1.msra.mxu0 0.0
    %1477 = vmatprep.subr.mxu0 0.0
    %1478 = vmatpush1.msra.mxu0 0.0
    %1479 = vmatprep.subr.mxu0 0.0
    %1480 = vmatpush1.msra.mxu0 0.0
    %1481 = vmatprep.subr.mxu0 0.0
    %1482 = vmatpush1.msra.mxu0 0.0
    %1483 = vmatprep.subr.mxu0 0.0
    %1484 = vmatpush1.msra.mxu0 0.0
    %1485 = vmatprep.subr.mxu0 0.0
    %1486 = vmatpush1.msra.mxu0 0.0
    %1487 = vmatprep.mubr.f32.mxu0 0.0
    %1488 = vmatmul.mubr.f32.gmra.mrb[0].mxu0 %v339
    %v1489 = vpop.f32.mrb[0].mxu0
    %v1490 = vadd.f32 0.0, %v1489
    %v1491 = vpop.f32.mrb[0].mxu0
    %1492 = vdwg.mxu0
    %v1493 = vadd.f32 %v264, %v1490
    %v1494 = vmax.f32 %v1493, 0.0
    %1495 = vmatprep.subr.mxu0 0.0
    %1496 = vmatpush1.msra.mxu0 %v1422
    %1497 = vmatprep.subr.mxu0 0.0
    %1498 = vmatpush1.msra.mxu0 0.0
    %1499 = vmatprep.subr.mxu0 0.0
    %1500 = vmatpush1.msra.mxu0 0.0
    %1501 = vmatprep.subr.mxu0 0.0
    %1502 = vmatpush1.msra.mxu0 0.0
    %1503 = vmatprep.subr.mxu0 0.0
    %1504 = vmatpush1.msra.mxu0 0.0
    %1505 = vmatprep.subr.mxu0 0.0
    %1506 = vmatpush1.msra.mxu0 0.0
    %1507 = vmatprep.subr.mxu0 0.0
    %1508 = vmatpush1.msra.mxu0 0.0
    %1509 = vmatprep.subr.mxu0 0.0
    %1510 = vmatpush1.msra.mxu0 0.0
    %1511 = vmatprep.subr.mxu0 0.0
    %1512 = vmatpush1.msra.mxu0 0.0
    %1513 = vmatprep.subr.mxu0 0.0
    %1514 = vmatpush1.msra.mxu0 0.0
    %1515 = vmatprep.subr.mxu0 0.0
    %1516 = vmatpush1.msra.mxu0 0.0
    %1517 = vmatprep.subr.mxu0 0.0
    %1518 = vmatpush1.msra.mxu0 0.0
    %1519 = vmatprep.subr.mxu0 0.0
    %1520 = vmatpush1.msra.mxu0 0.0
    %1521 = vmatprep.subr.mxu0 0.0
    %1522 = vmatpush1.msra.mxu0 0.0
    %1523 = vmatprep.subr.mxu0 0.0
    %1524 = vmatpush1.msra.mxu0 0.0
    %1525 = vmatprep.subr.mxu0 0.0
    %1526 = vmatpush1.msra.mxu0 0.0
    %1527 = vmatprep.subr.mxu0 0.0
    %1528 = vmatpush1.msra.mxu0 0.0
    %1529 = vmatprep.subr.mxu0 0.0
    %1530 = vmatpush1.msra.mxu0 0.0
    %1531 = vmatprep.subr.mxu0 0.0
    %1532 = vmatpush1.msra.mxu0 0.0
    %1533 = vmatprep.subr.mxu0 0.0
    %1534 = vmatpush1.msra.mxu0 0.0
    %1535 = vmatprep.subr.mxu0 0.0
    %1536 = vmatpush1.msra.mxu0 0.0
    %1537 = vmatprep.subr.mxu0 0.0
    %1538 = vmatpush1.msra.mxu0 0.0
    %1539 = vmatprep.subr.mxu0 0.0
    %1540 = vmatpush1.msra.mxu0 0.0
    %1541 = vmatprep.subr.mxu0 0.0
    %1542 = vmatpush1.msra.mxu0 0.0
    %1543 = vmatprep.subr.mxu0 0.0
    %1544 = vmatpush1.msra.mxu0 0.0
    %1545 = vmatprep.subr.mxu0 0.0
    %1546 = vmatpush1.msra.mxu0 0.0
    %1547 = vmatprep.subr.mxu0 0.0
    %1548 = vmatpush1.msra.mxu0 0.0
    %1549 = vmatprep.subr.mxu0 0.0
    %1550 = vmatpush1.msra.mxu0 0.0
    %1551 = vmatprep.subr.mxu0 0.0
    %1552 = vmatpush1.msra.mxu0 0.0
    %1553 = vmatprep.subr.mxu0 0.0
    %1554 = vmatpush1.msra.mxu0 0.0
    %1555 = vmatprep.subr.mxu0 0.0
    %1556 = vmatpush1.msra.mxu0 0.0
    %1557 = vmatprep.subr.mxu0 0.0
    %1558 = vmatpush1.msra.mxu0 0.0
    %1559 = vmatprep.mubr.f32.mxu0 0.0
    %1560 = vmatmul.mubr.f32.gmra.mrb[0].mxu0 %v415
    %v1561 = vpop.f32.mrb[0].mxu0
    %v1562 = vadd.f32 0.0, %v1561
    %v1563 = vpop.f32.mrb[0].mxu0
    %1564 = vdwg.mxu0
    %1565 = vmatprep.subr.mxu0 0.0
    %1566 = vmatpush1.msra.mxu0 %v1494
    %1567 = vmatprep.subr.mxu0 0.0
    %1568 = vmatpush1.msra.mxu0 0.0
    %1569 = vmatprep.subr.mxu0 0.0
    %1570 = vmatpush1.msra.mxu0 0.0
    %1571 = vmatprep.subr.mxu0 0.0
    %1572 = vmatpush1.msra.mxu0 0.0
    %1573 = vmatprep.subr.mxu0 0.0
    %1574 = vmatpush1.msra.mxu0 0.0
    %1575 = vmatprep.subr.mxu0 0.0
    %1576 = vmatpush1.msra.mxu0 0.0
    %1577 = vmatprep.subr.mxu0 0.0
    %1578 = vmatpush1.msra.mxu0 0.0
    %1579 = vmatprep.subr.mxu0 0.0
    %1580 = vmatpush1.msra.mxu0 0.0
    %1581 = vmatprep.subr.mxu0 0.0
    %1582 = vmatpush1.msra.mxu0 0.0
    %1583 = vmatprep.subr.mxu0 0.0
    %1584 = vmatpush1.msra.mxu0 0.0
    %1585 = vmatprep.subr.mxu0 0.0
    %1586 = vmatpush1.msra.mxu0 0.0
    %1587 = vmatprep.subr.mxu0 0.0
    %1588 = vmatpush1.msra.mxu0 0.0
    %1589 = vmatprep.subr.mxu0 0.0
    %1590 = vmatpush1.msra.mxu0 0.0
    %1591 = vmatprep.subr.mxu0 0.0
    %1592 = vmatpush1.msra.mxu0 0.0
    %1593 = vmatprep.subr.mxu0 0.0
    %1594 = vmatpush1.msra.mxu0 0.0
    %1595 = vmatprep.subr.mxu0 0.0
    %1596 = vmatpush1.msra.mxu0 0.0
    %1597 = vmatprep.subr.mxu0 0.0
    %1598 = vmatpush1.msra.mxu0 0.0
    %1599 = vmatprep.subr.mxu0 0.0
    %1600 = vmatpush1.msra.mxu0 0.0
    %1601 = vmatprep.subr.mxu0 0.0
    %1602 = vmatpush1.msra.mxu0 0.0
    %1603 = vmatprep.subr.mxu0 0.0
    %1604 = vmatpush1.msra.mxu0 0.0
    %1605 = vmatprep.subr.mxu0 0.0
    %1606 = vmatpush1.msra.mxu0 0.0
    %1607 = vmatprep.subr.mxu0 0.0
    %1608 = vmatpush1.msra.mxu0 0.0
    %1609 = vmatprep.subr.mxu0 0.0
    %1610 = vmatpush1.msra.mxu0 0.0
    %1611 = vmatprep.subr.mxu0 0.0
    %1612 = vmatpush1.msra.mxu0 0.0
    %1613 = vmatprep.subr.mxu0 0.0
    %1614 = vmatpush1.msra.mxu0 0.0
    %1615 = vmatprep.subr.mxu0 0.0
    %1616 = vmatpush1.msra.mxu0 0.0
    %1617 = vmatprep.subr.mxu0 0.0
    %1618 = vmatpush1.msra.mxu0 0.0
    %1619 = vmatprep.subr.mxu0 0.0
    %1620 = vmatpush1.msra.mxu0 0.0
    %1621 = vmatprep.subr.mxu0 0.0
    %1622 = vmatpush1.msra.mxu0 0.0
    %1623 = vmatprep.subr.mxu0 0.0
    %1624 = vmatpush1.msra.mxu0 0.0
    %1625 = vmatprep.subr.mxu0 0.0
    %1626 = vmatpush1.msra.mxu0 0.0
    %1627 = vmatprep.subr.mxu0 0.0
    %1628 = vmatpush1.msra.mxu0 0.0
    %1629 = vmatprep.mubr.f32.mxu0 0.0
    %1630 = vmatmul.mubr.f32.gmra.mrb[0].mxu0 %v489
    %v1631 = vpop.f32.mrb[0].mxu0
    %v1632 = vadd.f32 %v1562, %v1631
    %v1633 = vpop.f32.mrb[0].mxu0
    %1634 = vdwg.mxu0
    %v1635 = vadd.f32 %v1632, %v563
    %v1636 = vmax.f32 %v1635, 0.0
    %1637 = vmatprep.subr.mxu0 0.0
    %1638 = vmatpush1.msra.mxu0 %v1494
    %1639 = vmatprep.subr.mxu0 0.0
    %1640 = vmatpush1.msra.mxu0 0.0
    %1641 = vmatprep.subr.mxu0 0.0
    %1642 = vmatpush1.msra.mxu0 0.0
    %1643 = vmatprep.subr.mxu0 0.0
    %1644 = vmatpush1.msra.mxu0 0.0
    %1645 = vmatprep.subr.mxu0 0.0
    %1646 = vmatpush1.msra.mxu0 0.0
    %1647 = vmatprep.subr.mxu0 0.0
    %1648 = vmatpush1.msra.mxu0 0.0
    %1649 = vmatprep.subr.mxu0 0.0
    %1650 = vmatpush1.msra.mxu0 0.0
    %1651 = vmatprep.subr.mxu0 0.0
    %1652 = vmatpush1.msra.mxu0 0.0
    %1653 = vmatprep.subr.mxu0 0.0
    %1654 = vmatpush1.msra.mxu0 0.0
    %1655 = vmatprep.subr.mxu0 0.0
    %1656 = vmatpush1.msra.mxu0 0.0
    %1657 = vmatprep.subr.mxu0 0.0
    %1658 = vmatpush1.msra.mxu0 0.0
    %1659 = vmatprep.subr.mxu0 0.0
    %1660 = vmatpush1.msra.mxu0 0.0
    %1661 = vmatprep.subr.mxu0 0.0
    %1662 = vmatpush1.msra.mxu0 0.0
    %1663 = vmatprep.subr.mxu0 0.0
    %1664 = vmatpush1.msra.mxu0 0.0
    %1665 = vmatprep.subr.mxu0 0.0
    %1666 = vmatpush1.msra.mxu0 0.0
    %1667 = vmatprep.subr.mxu0 0.0
    %1668 = vmatpush1.msra.mxu0 0.0
    %1669 = vmatprep.subr.mxu0 0.0
    %1670 = vmatpush1.msra.mxu0 0.0
    %1671 = vmatprep.subr.mxu0 0.0
    %1672 = vmatpush1.msra.mxu0 0.0
    %1673 = vmatprep.subr.mxu0 0.0
    %1674 = vmatpush1.msra.mxu0 0.0
    %1675 = vmatprep.subr.mxu0 0.0
    %1676 = vmatpush1.msra.mxu0 0.0
    %1677 = vmatprep.subr.mxu0 0.0
    %1678 = vmatpush1.msra.mxu0 0.0
    %1679 = vmatprep.subr.mxu0 0.0
    %1680 = vmatpush1.msra.mxu0 0.0
    %1681 = vmatprep.subr.mxu0 0.0
    %1682 = vmatpush1.msra.mxu0 0.0
    %1683 = vmatprep.subr.mxu0 0.0
    %1684 = vmatpush1.msra.mxu0 0.0
    %1685 = vmatprep.subr.mxu0 0.0
    %1686 = vmatpush1.msra.mxu0 0.0
    %1687 = vmatprep.subr.mxu0 0.0
    %1688 = vmatpush1.msra.mxu0 0.0
    %1689 = vmatprep.subr.mxu0 0.0
    %1690 = vmatpush1.msra.mxu0 0.0
    %1691 = vmatprep.subr.mxu0 0.0
    %1692 = vmatpush1.msra.mxu0 0.0
    %1693 = vmatprep.subr.mxu0 0.0
    %1694 = vmatpush1.msra.mxu0 0.0
    %1695 = vmatprep.subr.mxu0 0.0
    %1696 = vmatpush1.msra.mxu0 0.0
    %1697 = vmatprep.subr.mxu0 0.0
    %1698 = vmatpush1.msra.mxu0 0.0
    %1699 = vmatprep.subr.mxu0 0.0
    %1700 = vmatpush1.msra.mxu0 0.0
    %1701 = vmatprep.mubr.f32.mxu0 0.0
    %1702 = vmatmul.mubr.f32.gmra.mrb[0].mxu0 %v339
    %v1703 = vpop.f32.mrb[0].mxu0
    %v1704 = vadd.f32 0.0, %v1703
    %v1705 = vpop.f32.mrb[0].mxu0
    %1706 = vdwg.mxu0
    %v1707 = vadd.f32 %v333, %v1704
    %v1708 = vmax.f32 %v1707, 0.0
    %1709 = vmatprep.subr.mxu0 0.0
    %1710 = vmatpush1.msra.mxu0 %v1636
    %1711 = vmatprep.subr.mxu0 0.0
    %1712 = vmatpush1.msra.mxu0 0.0
    %1713 = vmatprep.subr.mxu0 0.0
    %1714 = vmatpush1.msra.mxu0 0.0
    %1715 = vmatprep.subr.mxu0 0.0
    %1716 = vmatpush1.msra.mxu0 0.0
    %1717 = vmatprep.subr.mxu0 0.0
    %1718 = vmatpush1.msra.mxu0 0.0
    %1719 = vmatprep.subr.mxu0 0.0
    %1720 = vmatpush1.msra.mxu0 0.0
    %1721 = vmatprep.subr.mxu0 0.0
    %1722 = vmatpush1.msra.mxu0 0.0
    %1723 = vmatprep.subr.mxu0 0.0
    %1724 = vmatpush1.msra.mxu0 0.0
    %1725 = vmatprep.subr.mxu0 0.0
    %1726 = vmatpush1.msra.mxu0 0.0
    %1727 = vmatprep.subr.mxu0 0.0
    %1728 = vmatpush1.msra.mxu0 0.0
    %1729 = vmatprep.subr.mxu0 0.0
    %1730 = vmatpush1.msra.mxu0 0.0
    %1731 = vmatprep.subr.mxu0 0.0
    %1732 = vmatpush1.msra.mxu0 0.0
    %1733 = vmatprep.subr.mxu0 0.0
    %1734 = vmatpush1.msra.mxu0 0.0
    %1735 = vmatprep.subr.mxu0 0.0
    %1736 = vmatpush1.msra.mxu0 0.0
    %1737 = vmatprep.subr.mxu0 0.0
    %1738 = vmatpush1.msra.mxu0 0.0
    %1739 = vmatprep.subr.mxu0 0.0
    %1740 = vmatpush1.msra.mxu0 0.0
    %1741 = vmatprep.subr.mxu0 0.0
    %1742 = vmatpush1.msra.mxu0 0.0
    %1743 = vmatprep.subr.mxu0 0.0
    %1744 = vmatpush1.msra.mxu0 0.0
    %1745 = vmatprep.subr.mxu0 0.0
    %1746 = vmatpush1.msra.mxu0 0.0
    %1747 = vmatprep.subr.mxu0 0.0
    %1748 = vmatpush1.msra.mxu0 0.0
    %1749 = vmatprep.subr.mxu0 0.0
    %1750 = vmatpush1.msra.mxu0 0.0
    %1751 = vmatprep.subr.mxu0 0.0
    %1752 = vmatpush1.msra.mxu0 0.0
    %1753 = vmatprep.subr.mxu0 0.0
    %1754 = vmatpush1.msra.mxu0 0.0
    %1755 = vmatprep.subr.mxu0 0.0
    %1756 = vmatpush1.msra.mxu0 0.0
    %1757 = vmatprep.subr.mxu0 0.0
    %1758 = vmatpush1.msra.mxu0 0.0
    %1759 = vmatprep.subr.mxu0 0.0
    %1760 = vmatpush1.msra.mxu0 0.0
    %1761 = vmatprep.subr.mxu0 0.0
    %1762 = vmatpush1.msra.mxu0 0.0
    %1763 = vmatprep.subr.mxu0 0.0
    %1764 = vmatpush1.msra.mxu0 0.0
    %1765 = vmatprep.subr.mxu0 0.0
    %1766 = vmatpush1.msra.mxu0 0.0
    %1767 = vmatprep.subr.mxu0 0.0
    %1768 = vmatpush1.msra.mxu0 0.0
    %1769 = vmatprep.subr.mxu0 0.0
    %1770 = vmatpush1.msra.mxu0 0.0
    %1771 = vmatprep.subr.mxu0 0.0
    %1772 = vmatpush1.msra.mxu0 0.0
    %1773 = vmatprep.mubr.f32.mxu0 0.0
    %1774 = vmatmul.mubr.f32.gmra.mrb[0].mxu0 %v415
    %v1775 = vpop.f32.mrb[0].mxu0
    %v1776 = vadd.f32 0.0, %v1775
    %v1777 = vpop.f32.mrb[0].mxu0
    %1778 = vdwg.mxu0
    %1779 = vmatprep.subr.mxu0 0.0
    %1780 = vmatpush1.msra.mxu0 %v1708
    %1781 = vmatprep.subr.mxu0 0.0
    %1782 = vmatpush1.msra.mxu0 0.0
    %1783 = vmatprep.subr.mxu0 0.0
    %1784 = vmatpush1.msra.mxu0 0.0
    %1785 = vmatprep.subr.mxu0 0.0
    %1786 = vmatpush1.msra.mxu0 0.0
    %1787 = vmatprep.subr.mxu0 0.0
    %1788 = vmatpush1.msra.mxu0 0.0
    %1789 = vmatprep.subr.mxu0 0.0
    %1790 = vmatpush1.msra.mxu0 0.0
    %1791 = vmatprep.subr.mxu0 0.0
    %1792 = vmatpush1.msra.mxu0 0.0
    %1793 = vmatprep.subr.mxu0 0.0
    %1794 = vmatpush1.msra.mxu0 0.0
    %1795 = vmatprep.subr.mxu0 0.0
    %1796 = vmatpush1.msra.mxu0 0.0
    %1797 = vmatprep.subr.mxu0 0.0
    %1798 = vmatpush1.msra.mxu0 0.0
    %1799 = vmatprep.subr.mxu0 0.0
    %1800 = vmatpush1.msra.mxu0 0.0
    %1801 = vmatprep.subr.mxu0 0.0
    %1802 = vmatpush1.msra.mxu0 0.0
    %1803 = vmatprep.subr.mxu0 0.0
    %1804 = vmatpush1.msra.mxu0 0.0
    %1805 = vmatprep.subr.mxu0 0.0
    %1806 = vmatpush1.msra.mxu0 0.0
    %1807 = vmatprep.subr.mxu0 0.0
    %1808 = vmatpush1.msra.mxu0 0.0
    %1809 = vmatprep.subr.mxu0 0.0
    %1810 = vmatpush1.msra.mxu0 0.0
    %1811 = vmatprep.subr.mxu0 0.0
    %1812 = vmatpush1.msra.mxu0 0.0
    %1813 = vmatprep.subr.mxu0 0.0
    %1814 = vmatpush1.msra.mxu0 0.0
    %1815 = vmatprep.subr.mxu0 0.0
    %1816 = vmatpush1.msra.mxu0 0.0
    %1817 = vmatprep.subr.mxu0 0.0
    %1818 = vmatpush1.msra.mxu0 0.0
    %1819 = vmatprep.subr.mxu0 0.0
    %1820 = vmatpush1.msra.mxu0 0.0
    %1821 = vmatprep.subr.mxu0 0.0
    %1822 = vmatpush1.msra.mxu0 0.0
    %1823 = vmatprep.subr.mxu0 0.0
    %1824 = vmatpush1.msra.mxu0 0.0
    %1825 = vmatprep.subr.mxu0 0.0
    %1826 = vmatpush1.msra.mxu0 0.0
    %1827 = vmatprep.subr.mxu0 0.0
    %1828 = vmatpush1.msra.mxu0 0.0
    %1829 = vmatprep.subr.mxu0 0.0
    %1830 = vmatpush1.msra.mxu0 0.0
    %1831 = vmatprep.subr.mxu0 0.0
    %1832 = vmatpush1.msra.mxu0 0.0
    %1833 = vmatprep.subr.mxu0 0.0
    %1834 = vmatpush1.msra.mxu0 0.0
    %1835 = vmatprep.subr.mxu0 0.0
    %1836 = vmatpush1.msra.mxu0 0.0
    %1837 = vmatprep.subr.mxu0 0.0
    %1838 = vmatpush1.msra.mxu0 0.0
    %1839 = vmatprep.subr.mxu0 0.0
    %1840 = vmatpush1.msra.mxu0 0.0
    %1841 = vmatprep.subr.mxu0 0.0
    %1842 = vmatpush1.msra.mxu0 0.0
    %1843 = vmatprep.mubr.f32.mxu0 0.0
    %1844 = vmatmul.mubr.f32.gmra.mrb[0].mxu0 %v489
    %v1845 = vpop.f32.mrb[0].mxu0
    %v1846 = vadd.f32 %v1776, %v1845
    %v1847 = vpop.f32.mrb[0].mxu0
    %1848 = vdwg.mxu0
    %v1849 = vadd.f32 %v1846, %v563
    %v1850 = vmax.f32 %v1849, 0.0
    %1851 = vmatprep.subr.mxu0 0.0
    %1852 = vmatpush1.msra.mxu0 %v1708
    %1853 = vmatprep.subr.mxu0 0.0
    %1854 = vmatpush1.msra.mxu0 0.0
    %1855 = vmatprep.subr.mxu0 0.0
    %1856 = vmatpush1.msra.mxu0 0.0
    %1857 = vmatprep.subr.mxu0 0.0
    %1858 = vmatpush1.msra.mxu0 0.0
    %1859 = vmatprep.subr.mxu0 0.0
    %1860 = vmatpush1.msra.mxu0 0.0
    %1861 = vmatprep.subr.mxu0 0.0
    %1862 = vmatpush1.msra.mxu0 0.0
    %1863 = vmatprep.subr.mxu0 0.0
    %1864 = vmatpush1.msra.mxu0 0.0
    %1865 = vmatprep.subr.mxu0 0.0
    %1866 = vmatpush1.msra.mxu0 0.0
    %1867 = vmatprep.subr.mxu0 0.0
    %1868 = vmatpush1.msra.mxu0 0.0
    %1869 = vmatprep.subr.mxu0 0.0
    %1870 = vmatpush1.msra.mxu0 0.0
    %1871 = vmatprep.subr.mxu0 0.0
    %1872 = vmatpush1.msra.mxu0 0.0
    %1873 = vmatprep.subr.mxu0 0.0
    %1874 = vmatpush1.msra.mxu0 0.0
    %1875 = vmatprep.subr.mxu0 0.0
    %1876 = vmatpush1.msra.mxu0 0.0
    %1877 = vmatprep.subr.mxu0 0.0
    %1878 = vmatpush1.msra.mxu0 0.0
    %1879 = vmatprep.subr.mxu0 0.0
    %1880 = vmatpush1.msra.mxu0 0.0
    %1881 = vmatprep.subr.mxu0 0.0
    %1882 = vmatpush1.msra.mxu0 0.0
    %1883 = vmatprep.subr.mxu0 0.0
    %1884 = vmatpush1.msra.mxu0 0.0
    %1885 = vmatprep.subr.mxu0 0.0
    %1886 = vmatpush1.msra.mxu0 0.0
    %1887 = vmatprep.subr.mxu0 0.0
    %1888 = vmatpush1.msra.mxu0 0.0
    %1889 = vmatprep.subr.mxu0 0.0
    %1890 = vmatpush1.msra.mxu0 0.0
    %1891 = vmatprep.subr.mxu0 0.0
    %1892 = vmatpush1.msra.mxu0 0.0
    %1893 = vmatprep.subr.mxu0 0.0
    %1894 = vmatpush1.msra.mxu0 0.0
    %1895 = vmatprep.subr.mxu0 0.0
    %1896 = vmatpush1.msra.mxu0 0.0
    %1897 = vmatprep.subr.mxu0 0.0
    %1898 = vmatpush1.msra.mxu0 0.0
    %1899 = vmatprep.subr.mxu0 0.0
    %1900 = vmatpush1.msra.mxu0 0.0
    %1901 = vmatprep.subr.mxu0 0.0
    %1902 = vmatpush1.msra.mxu0 0.0
    %1903 = vmatprep.subr.mxu0 0.0
    %1904 = vmatpush1.msra.mxu0 0.0
    %1905 = vmatprep.subr.mxu0 0.0
    %1906 = vmatpush1.msra.mxu0 0.0
    %1907 = vmatprep.subr.mxu0 0.0
    %1908 = vmatpush1.msra.mxu0 0.0
    %1909 = vmatprep.subr.mxu0 0.0
    %1910 = vmatpush1.msra.mxu0 0.0
    %1911 = vmatprep.subr.mxu0 0.0
    %1912 = vmatpush1.msra.mxu0 0.0
    %1913 = vmatprep.subr.mxu0 0.0
    %1914 = vmatpush1.msra.mxu0 0.0
    %1915 = vmatprep.mubr.f32.mxu0 0.0
    %1916 = vmatmul.mubr.f32.gmra.mrb[0].mxu0 %v339
    %v1917 = vpop.f32.mrb[0].mxu0
    %v1918 = vadd.f32 0.0, %v1917
    %v1919 = vpop.f32.mrb[0].mxu0
    %1920 = vdwg.mxu0
    %v1921 = vadd.f32 %v335, %v1918
    %v1922 = vmax.f32 %v1921, 0.0
    %1923 = vmatprep.subr.mxu0 0.0
    %1924 = vmatpush1.msra.mxu0 %v1850
    %1925 = vmatprep.subr.mxu0 0.0
    %1926 = vmatpush1.msra.mxu0 0.0
    %1927 = vmatprep.subr.mxu0 0.0
    %1928 = vmatpush1.msra.mxu0 0.0
    %1929 = vmatprep.subr.mxu0 0.0
    %1930 = vmatpush1.msra.mxu0 0.0
    %1931 = vmatprep.subr.mxu0 0.0
    %1932 = vmatpush1.msra.mxu0 0.0
    %1933 = vmatprep.subr.mxu0 0.0
    %1934 = vmatpush1.msra.mxu0 0.0
    %1935 = vmatprep.subr.mxu0 0.0
    %1936 = vmatpush1.msra.mxu0 0.0
    %1937 = vmatprep.subr.mxu0 0.0
    %1938 = vmatpush1.msra.mxu0 0.0
    %1939 = vmatprep.subr.mxu0 0.0
    %1940 = vmatpush1.msra.mxu0 0.0
    %1941 = vmatprep.subr.mxu0 0.0
    %1942 = vmatpush1.msra.mxu0 0.0
    %1943 = vmatprep.subr.mxu0 0.0
    %1944 = vmatpush1.msra.mxu0 0.0
    %1945 = vmatprep.subr.mxu0 0.0
    %1946 = vmatpush1.msra.mxu0 0.0
    %1947 = vmatprep.subr.mxu0 0.0
    %1948 = vmatpush1.msra.mxu0 0.0
    %1949 = vmatprep.subr.mxu0 0.0
    %1950 = vmatpush1.msra.mxu0 0.0
    %1951 = vmatprep.subr.mxu0 0.0
    %1952 = vmatpush1.msra.mxu0 0.0
    %1953 = vmatprep.subr.mxu0 0.0
    %1954 = vmatpush1.msra.mxu0 0.0
    %1955 = vmatprep.subr.mxu0 0.0
    %1956 = vmatpush1.msra.mxu0 0.0
    %1957 = vmatprep.subr.mxu0 0.0
    %1958 = vmatpush1.msra.mxu0 0.0
    %1959 = vmatprep.subr.mxu0 0.0
    %1960 = vmatpush1.msra.mxu0 0.0
    %1961 = vmatprep.subr.mxu0 0.0
    %1962 = vmatpush1.msra.mxu0 0.0
    %1963 = vmatprep.subr.mxu0 0.0
    %1964 = vmatpush1.msra.mxu0 0.0
    %1965 = vmatprep.subr.mxu0 0.0
    %1966 = vmatpush1.msra.mxu0 0.0
    %1967 = vmatprep.subr.mxu0 0.0
    %1968 = vmatpush1.msra.mxu0 0.0
    %1969 = vmatprep.subr.mxu0 0.0
    %1970 = vmatpush1.msra.mxu0 0.0
    %1971 = vmatprep.subr.mxu0 0.0
    %1972 = vmatpush1.msra.mxu0 0.0
    %1973 = vmatprep.subr.mxu0 0.0
    %1974 = vmatpush1.msra.mxu0 0.0
    %1975 = vmatprep.subr.mxu0 0.0
    %1976 = vmatpush1.msra.mxu0 0.0
    %1977 = vmatprep.subr.mxu0 0.0
    %1978 = vmatpush1.msra.mxu0 0.0
    %1979 = vmatprep.subr.mxu0 0.0
    %1980 = vmatpush1.msra.mxu0 0.0
    %1981 = vmatprep.subr.mxu0 0.0
    %1982 = vmatpush1.msra.mxu0 0.0
    %1983 = vmatprep.subr.mxu0 0.0
    %1984 = vmatpush1.msra.mxu0 0.0
    %1985 = vmatprep.subr.mxu0 0.0
    %1986 = vmatpush1.msra.mxu0 0.0
    %1987 = vmatprep.mubr.f32.mxu0 0.0
    %1988 = vmatmul.mubr.f32.gmra.mrb[0].mxu0 %v415
    %v1989 = vpop.f32.mrb[0].mxu0
    %v1990 = vadd.f32 0.0, %v1989
    %v1991 = vpop.f32.mrb[0].mxu0
    %1992 = vdwg.mxu0
    %1993 = vmatprep.subr.mxu0 0.0
    %1994 = vmatpush1.msra.mxu0 %v1922
    %1995 = vmatprep.subr.mxu0 0.0
    %1996 = vmatpush1.msra.mxu0 0.0
    %1997 = vmatprep.subr.mxu0 0.0
    %1998 = vmatpush1.msra.mxu0 0.0
    %1999 = vmatprep.subr.mxu0 0.0
    %2000 = vmatpush1.msra.mxu0 0.0
    %2001 = vmatprep.subr.mxu0 0.0
    %2002 = vmatpush1.msra.mxu0 0.0
    %2003 = vmatprep.subr.mxu0 0.0
    %2004 = vmatpush1.msra.mxu0 0.0
    %2005 = vmatprep.subr.mxu0 0.0
    %2006 = vmatpush1.msra.mxu0 0.0
    %2007 = vmatprep.subr.mxu0 0.0
    %2008 = vmatpush1.msra.mxu0 0.0
    %2009 = vmatprep.subr.mxu0 0.0
    %2010 = vmatpush1.msra.mxu0 0.0
    %2011 = vmatprep.subr.mxu0 0.0
    %2012 = vmatpush1.msra.mxu0 0.0
    %2013 = vmatprep.subr.mxu0 0.0
    %2014 = vmatpush1.msra.mxu0 0.0
    %2015 = vmatprep.subr.mxu0 0.0
    %2016 = vmatpush1.msra.mxu0 0.0
    %2017 = vmatprep.subr.mxu0 0.0
    %2018 = vmatpush1.msra.mxu0 0.0
    %2019 = vmatprep.subr.mxu0 0.0
    %2020 = vmatpush1.msra.mxu0 0.0
    %2021 = vmatprep.subr.mxu0 0.0
    %2022 = vmatpush1.msra.mxu0 0.0
    %2023 = vmatprep.subr.mxu0 0.0
    %2024 = vmatpush1.msra.mxu0 0.0
    %2025 = vmatprep.subr.mxu0 0.0
    %2026 = vmatpush1.msra.mxu0 0.0
    %2027 = vmatprep.subr.mxu0 0.0
    %2028 = vmatpush1.msra.mxu0 0.0
    %2029 = vmatprep.subr.mxu0 0.0
    %2030 = vmatpush1.msra.mxu0 0.0
    %2031 = vmatprep.subr.mxu0 0.0
    %2032 = vmatpush1.msra.mxu0 0.0
    %2033 = vmatprep.subr.mxu0 0.0
    %2034 = vmatpush1.msra.mxu0 0.0
    %2035 = vmatprep.subr.mxu0 0.0
    %2036 = vmatpush1.msra.mxu0 0.0
    %2037 = vmatprep.subr.mxu0 0.0
    %2038 = vmatpush1.msra.mxu0 0.0
    %2039 = vmatprep.subr.mxu0 0.0
    %2040 = vmatpush1.msra.mxu0 0.0
    %2041 = vmatprep.subr.mxu0 0.0
    %2042 = vmatpush1.msra.mxu0 0.0
    %2043 = vmatprep.subr.mxu0 0.0
    %2044 = vmatpush1.msra.mxu0 0.0
    %2045 = vmatprep.subr.mxu0 0.0
    %2046 = vmatpush1.msra.mxu0 0.0
    %2047 = vmatprep.subr.mxu0 0.0
    %2048 = vmatpush1.msra.mxu0 0.0
    %2049 = vmatprep.subr.mxu0 0.0
    %2050 = vmatpush1.msra.mxu0 0.0
    %2051 = vmatprep.subr.mxu0 0.0
    %2052 = vmatpush1.msra.mxu0 0.0
    %2053 = vmatprep.subr.mxu0 0.0
    %2054 = vmatpush1.msra.mxu0 0.0
    %2055 = vmatprep.subr.mxu0 0.0
    %2056 = vmatpush1.msra.mxu0 0.0
    %2057 = vmatprep.mubr.f32.mxu0 0.0
    %2058 = vmatmul.mubr.f32.gmra.mrb[0].mxu0 %v489
    %v2059 = vpop.f32.mrb[0].mxu0
    %v2060 = vadd.f32 %v1990, %v2059
    %v2061 = vpop.f32.mrb[0].mxu0
    %2062 = vdwg.mxu0
    %v2063 = vadd.f32 %v2060, %v563
    %v2064 = vmax.f32 %v2063, 0.0
    %2065 = vset.pattern.permute.xlu0 42
    %2066 = vperm.xlu0 %2065, %v36
    %v2067 = vpop.permute.xlu0 %2066
    %2069 = vrot.lane.b32.xlu0 %v36, 96
    %v2070 = vpop.permute.xlu0 %2069
    %v2071 = vsel %vm50, %v2070, 0
    %2073 = vmatprep.subr.mxu0 0.0
    %2074 = vmatpush1.msra.mxu0 %v2064
    %2075 = vmatprep.subr.mxu0 0.0
    %2076 = vmatpush1.msra.mxu0 0.0
    %2077 = vmatprep.subr.mxu0 0.0
    %2078 = vmatpush1.msra.mxu0 0.0
    %2079 = vmatprep.subr.mxu0 0.0
    %2080 = vmatpush1.msra.mxu0 0.0
    %2081 = vmatprep.subr.mxu0 0.0
    %2082 = vmatpush1.msra.mxu0 0.0
    %2083 = vmatprep.subr.mxu0 0.0
    %2084 = vmatpush1.msra.mxu0 0.0
    %2085 = vmatprep.subr.mxu0 0.0
    %2086 = vmatpush1.msra.mxu0 0.0
    %2087 = vmatprep.subr.mxu0 0.0
    %2088 = vmatpush1.msra.mxu0 0.0
    %2089 = vmatprep.subr.mxu0 0.0
    %2090 = vmatpush1.msra.mxu0 0.0
    %2091 = vmatprep.subr.mxu0 0.0
    %2092 = vmatpush1.msra.mxu0 0.0
    %2093 = vmatprep.subr.mxu0 0.0
    %2094 = vmatpush1.msra.mxu0 0.0
    %2095 = vmatprep.subr.mxu0 0.0
    %2096 = vmatpush1.msra.mxu0 0.0
    %2097 = vmatprep.subr.mxu0 0.0
    %2098 = vmatpush1.msra.mxu0 0.0
    %2099 = vmatprep.subr.mxu0 0.0
    %2100 = vmatpush1.msra.mxu0 0.0
    %2101 = vmatprep.subr.mxu0 0.0
    %2102 = vmatpush1.msra.mxu0 0.0
    %2103 = vmatprep.subr.mxu0 0.0
    %2104 = vmatpush1.msra.mxu0 0.0
    %2105 = vmatprep.subr.mxu0 0.0
    %2106 = vmatpush1.msra.mxu0 0.0
    %2107 = vmatprep.subr.mxu0 0.0
    %2108 = vmatpush1.msra.mxu0 0.0
    %2109 = vmatprep.subr.mxu0 0.0
    %2110 = vmatpush1.msra.mxu0 0.0
    %2111 = vmatprep.subr.mxu0 0.0
    %2112 = vmatpush1.msra.mxu0 0.0
    %2113 = vmatprep.subr.mxu0 0.0
    %2114 = vmatpush1.msra.mxu0 0.0
    %2115 = vmatprep.subr.mxu0 0.0
    %2116 = vmatpush1.msra.mxu0 0.0
    %2117 = vmatprep.subr.mxu0 0.0
    %2118 = vmatpush1.msra.mxu0 0.0
    %2119 = vmatprep.subr.mxu0 0.0
    %2120 = vmatpush1.msra.mxu0 0.0
    %2121 = vmatprep.subr.mxu0 0.0
    %2122 = vmatpush1.msra.mxu0 0.0
    %2123 = vmatprep.subr.mxu0 0.0
    %2124 = vmatpush1.msra.mxu0 0.0
    %2125 = vmatprep.subr.mxu0 0.0
    %2126 = vmatpush1.msra.mxu0 0.0
    %2127 = vmatprep.subr.mxu0 0.0
    %2128 = vmatpush1.msra.mxu0 0.0
    %2129 = vmatprep.subr.mxu0 0.0
    %2130 = vmatpush1.msra.mxu0 0.0
    %2131 = vmatprep.subr.mxu0 0.0
    %2132 = vmatpush1.msra.mxu0 0.0
    %2133 = vmatprep.subr.mxu0 0.0
    %2134 = vmatpush1.msra.mxu0 0.0
    %2135 = vmatprep.subr.mxu0 0.0
    %2136 = vmatpush1.msra.mxu0 0.0
    %2137 = vmatprep.mubr.f32.mxu0 0.0
    %2138 = vmatmul.mubr.f32.gmra.mrb[0].mxu0 %v2071
    %v2139 = vpop.f32.mrb[0].mxu0
    %v2140 = vadd.f32 %v2067, %v2139
    %v2141 = vpop.f32.mrb[0].mxu0
    %2142 = vdwg.mxu0
    %2143 = vst [vmem:[#allocation7] sm:$0xff] %v2140
    // Predicated region
    $region18: #{tpu_custom_call.1} parent=1 // pred_check
      _
    $region19: #{tpu_custom_call.1} parent=1 // pred_check_branch
      %2145 = sbr.rel (0) target = $region21
    $region20: #{tpu_custom_call.1} parent=1 // pred_region
      %s2147 = ssub.s32 128, 128
      %2148 = vsyncadd [#allocation4], %s2147
      %s2150 = sshll.u32 [#allocation7], 4
      %s2151 = int_to_ptr.vmem [resolvable:$true] %s2150
      %2153 = dma.vmem_to_hbm [thread:$0]  %s2151, 128, %s2, [#allocation4]
    $region21: #{tpu_custom_call.1} parent=1 // pred_fallthru
      _
    // Predicated region
    $region22: #{tpu_custom_call.1} parent=1 // pred_check
      _
    $region23: #{tpu_custom_call.1} parent=1 // pred_check_branch
      %2155 = sbr.rel (0) target = $region25
    $region24: #{tpu_custom_call.1} parent=1 // pred_region
      %2156 = dma.done [#allocation4], 128
    $region25: #{tpu_custom_call.1} parent=1 // pred_fallthru
      _
    %2157 = vsyncpa [#allocation3], 1
    %2158 = vsyncpa [#allocation6], 1
    %2159 = vsyncpa [#allocation4], 1

</llo_original>
